<compile_context>
chip_gen: v5e
topology: v5e:2x2
jax: 0.10.0
libtpu: 0.0.40
codegen_flags: <defaults>
</compile_context>

<pallas_src>
import jax
import jax.numpy as jnp
import numpy as np
from jax.experimental import pallas as pl
from jax.experimental.pallas import tpu as pltpu

# Make the pure-JAX reference and the kernel use full-precision matmuls so the
# comparison is apples-to-apples (TPU default matmul precision is bf16-ish).
jax.config.update("jax_default_matmul_precision", "highest")


def _project_kernel(x_ref, tmat_ref, m_ref):
    # x_ref: [B, IN], tmat_ref: [OUT*K, IN], m_ref: [B, OUT*K]
    # One unbatched matmul, lane dim = OUT*K (MXU-friendly on all generations).
    m_ref[...] = jnp.einsum(
        'bi,oi->bo', x_ref[...], tmat_ref[...],
        preferred_element_type=jnp.float32)


def _pairwise_kernel(mt_a_ref, mt_ref, feats_ref):
    # mt_a_ref : [OUT, TA, K]  a-tile of M in j-leading layout (streams)
    # mt_ref   : [OUT, B,  K]  full M (resident across the grid)
    # feats_ref: [OUT, TA]     dense output tile
    mt_a = mt_a_ref[...]
    mt = mt_ref[...]
    _, ta, _ = mt_a.shape
    b = mt.shape[1]

    # Gram identity: sq[j,a,b] = r_a[j,a] + r_b[j,b] - 2 <M[a,j,:], M[b,j,:]>,
    # with the inner products batched over j on the MXU.
    g = jnp.einsum('jak,jbk->jab', mt_a, mt,
                   preferred_element_type=jnp.float32)           # [OUT, TA, B]
    r_a = jnp.sum(mt_a * mt_a, axis=-1)                          # [OUT, TA]
    r_b = jnp.sum(mt * mt, axis=-1)                              # [OUT, B]
    sq = jnp.maximum(r_a[:, :, None] + r_b[:, None, :] - 2.0 * g, 0.0)

    nrm = jnp.sqrt(sq)                                           # EUP
    c = jnp.exp(-jnp.minimum(nrm, 10.0))                         # EUP

    # Self-pair handled analytically: zero the GLOBAL-diagonal entries with a
    # single 2-D mask (global a index = tile offset + local row) and add the
    # exact self term c[a,a,j] == exp(0) == 1.
    a0 = pl.program_id(0) * ta
    ia = jax.lax.broadcasted_iota(jnp.int32, (ta, b), 0) + a0
    ib = jax.lax.broadcasted_iota(jnp.int32, (ta, b), 1)
    c = jnp.where((ia == ib)[None, :, :], 0.0, c)
    feats_ref[...] = jnp.sum(c, axis=2) + 1.0                    # [OUT, TA]


def _pad(v, m):
    return ((v + m - 1) // m) * m


@jax.jit
def minibatch_discrimination(x, T):
    B, in_features = x.shape
    in_f2, out_features, num_kernels = T.shape
    assert in_f2 == in_features

    x = x.astype(jnp.float32)
    # Parameter relayout [IN, OUT, K] -> [OUT*K, IN].  Under jit this is folded
    # by XLA; in a real model keep T stored pre-transposed to avoid the HBM
    # round-trip entirely.
    t_mat = jnp.transpose(T.astype(jnp.float32), (1, 2, 0)).reshape(
        out_features * num_kernels, in_features)

    # Stage 1: M = x @ T as one lane-wide MXU matmul (no grid needed).
    m_flat = pl.pallas_call(
        _project_kernel,
        out_shape=jax.ShapeDtypeStruct(
            (B, out_features * num_kernels), jnp.float32),
    )(x, t_mat)

    # Linear-size relayout to the batched-Gram layout [OUT, B, K].
    mt = jnp.transpose(m_flat.reshape(B, out_features, num_kernels), (1, 0, 2))

    # Stage 2: pairwise minibatch features; the 'a' axis is tiled onto a
    # parallel grid.  TA bounds the per-step working set (re-derive smaller on
    # v7x's 64 MiB VMEM at large B/OUT).
    ta = B if B <= 256 else 256
    grid = (pl.cdiv(B, ta),)

    # Padded-footprint VMEM estimate (f32): double-buffered a-tile, resident
    # full M, the [OUT,TA,B] intermediates, and the output tile.
    pk = _pad(num_kernels, 128)
    fp = 4 * (2 * _pad(out_features, 8) * _pad(ta, 8) * pk
              + 2 * _pad(out_features, 8) * _pad(B, 8) * pk
              + 3 * _pad(out_features, 8) * _pad(ta, 8) * _pad(B, 128)
              + 2 * _pad(out_features, 8) * _pad(ta, 128))
    vmem_limit = int(min(max(fp * 3 // 2, 32 * 1024 * 1024), 64 * 1024 * 1024))

    feats_t = pl.pallas_call(
        _pairwise_kernel,
        out_shape=jax.ShapeDtypeStruct((out_features, B), jnp.float32),
        grid=grid,
        in_specs=[
            # a-tile of M (streams with the grid)
            pl.BlockSpec((out_features, ta, num_kernels), lambda i: (0, i, 0)),
            # full M (constant index_map -> stays resident, DMA'd once)
            pl.BlockSpec((out_features, B, num_kernels), lambda i: (0, 0, 0)),
        ],
        out_specs=pl.BlockSpec((out_features, ta), lambda i: (0, i)),
        compiler_params=pltpu.CompilerParams(
            dimension_semantics=("parallel",),
            vmem_limit_bytes=vmem_limit,
        ),
    )(mt, mt)

    # Cheap wrapper-side finish: [OUT, B] -> [B, OUT] and torch.cat([x, feats]).
    return jnp.concatenate([x, feats_t.T], axis=1)


def _reference(x, T):
    M = jnp.einsum('bi,ijk->bjk', x, T, precision=jax.lax.Precision.HIGHEST)
    diff = M[None, :, :, :] - M[:, None, :, :]
    c = jnp.exp(-jnp.minimum(jnp.linalg.norm(diff, axis=3), 10.0))
    feats = jnp.sum(c, axis=1)
    return jnp.concatenate([x, feats], axis=1)


if __name__ == "__main__":
    B, IN_FEATURES, OUT_FEATURES, NUM_KERNELS = 8, 16, 8, 32

    key = jax.random.PRNGKey(0)
    kx, kt = jax.random.split(key)
    # 0.25 scale keeps most pairwise norms below the clamp (=10) so the exp
    # path is actually exercised, not saturated.
    x = 0.25 * jax.random.normal(kx, (B, IN_FEATURES), dtype=jnp.float32)
    # nn.Parameter(torch.randn(in_features, out_features, num_kernels)):
    T = jax.random.normal(kt, (IN_FEATURES, OUT_FEATURES, NUM_KERNELS),
                          dtype=jnp.float32)

    out = jax.block_until_ready(minibatch_discrimination(x, T))
    ref = jax.block_until_ready(_reference(x, T))

    assert out.shape == (B, IN_FEATURES + OUT_FEATURES)
    np.testing.assert_allclose(np.asarray(out), np.asarray(ref),
                               rtol=1e-3, atol=1e-4)

    print("KERNEL_OK")
</pallas_src>

<mosaic_0001>
module attributes {stable_mosaic.version = 11 : i64} {
  func.func @_project_kernel(%arg0: memref<8x16xf32, #tpu.memory_space<vmem>>, %arg1: memref<256x16xf32, #tpu.memory_space<vmem>>, %arg2: memref<8x256xf32, #tpu.memory_space<vmem>>) attributes {dimension_semantics = [], scalar_prefetch = 0 : i64, scratch_operands = 0 : i64, tpu.core_type = #tpu.core_type<tc>} {
    %c0 = arith.constant 0 : index
    %c0_0 = arith.constant 0 : index
    %0 = vector.load %arg0[%c0, %c0_0] : memref<8x16xf32, #tpu.memory_space<vmem>>, vector<8x16xf32>
    %c0_1 = arith.constant 0 : index
    %c0_2 = arith.constant 0 : index
    %1 = vector.load %arg1[%c0_1, %c0_2] : memref<256x16xf32, #tpu.memory_space<vmem>>, vector<256x16xf32>
    "tpu.trace_start"() <{level = 10 : i32, message = "bi,oi->bo"}> : () -> ()
    %cst = arith.constant dense<0.000000e+00> : vector<8x256xf32>
    %2 = tpu.matmul %0, %1, %cst {dimension_numbers = #tpu.dot_dimension_numbers<[1], [1], [0], [0], [0, 0, 1, 0], [], []>, precision = #tpu.contract_precision<fp32>} : vector<8x16xf32>, vector<256x16xf32>, vector<8x256xf32> -> vector<8x256xf32>
    "tpu.trace_stop"() : () -> ()
    %c0_3 = arith.constant 0 : index
    %c0_4 = arith.constant 0 : index
    %3 = vector.load %arg2[%c0_3, %c0_4] : memref<8x256xf32, #tpu.memory_space<vmem>>, vector<8x256xf32>
    tpu.vector_store %arg2[%c0_3, %c0_4], %2 {strides = array<i32>} : memref<8x256xf32, #tpu.memory_space<vmem>>, vector<8x256xf32>,
    return
  }
}

module attributes {stable_mosaic.version = 11 : i64} {
  func.func @_pairwise_kernel(%arg0: i32, %arg1: memref<8x8x32xf32, #tpu.memory_space<vmem>>, %arg2: memref<8x8x32xf32, #tpu.memory_space<vmem>>, %arg3: memref<8x8xf32, #tpu.memory_space<vmem>>) attributes {dimension_semantics = [#tpu.dimension_semantics<parallel>], iteration_bounds = array<i64: 1>, scalar_prefetch = 0 : i64, scratch_operands = 0 : i64, tpu.core_type = #tpu.core_type<tc>, window_params = [{transform_indices = @transform_0, window_bounds = array<i64: 8, 8, 32>}, {pipeline_mode = #tpu.pipeline_mode<synchronous>, transform_indices = @transform_1, window_bounds = array<i64: 8, 8, 32>}, {transform_indices = @transform_2, window_bounds = array<i64: 8, 8>}]} {
    %c0 = arith.constant 0 : index
    %c0_0 = arith.constant 0 : index
    %c0_1 = arith.constant 0 : index
    %0 = vector.load %arg1[%c0, %c0_0, %c0_1] : memref<8x8x32xf32, #tpu.memory_space<vmem>>, vector<8x8x32xf32>
    %c0_2 = arith.constant 0 : index
    %c0_3 = arith.constant 0 : index
    %c0_4 = arith.constant 0 : index
    %1 = vector.load %arg2[%c0_2, %c0_3, %c0_4] : memref<8x8x32xf32, #tpu.memory_space<vmem>>, vector<8x8x32xf32>
    "tpu.trace_start"() <{level = 10 : i32, message = "jak,jbk->jab"}> : () -> ()
    %cst = arith.constant dense<0.000000e+00> : vector<8x8x8xf32>
    %2 = tpu.matmul %0, %1, %cst {dimension_numbers = #tpu.dot_dimension_numbers<[2], [2], [1], [1], [0, 0, 0, 1, 1, 1], [0], [0]>, precision = #tpu.contract_precision<fp32>} : vector<8x8x32xf32>, vector<8x8x32xf32>, vector<8x8x8xf32> -> vector<8x8x8xf32>
    "tpu.trace_stop"() : () -> ()
    %3 = arith.mulf %0, %0 : vector<8x8x32xf32>
    %cst_5 = arith.constant dense<0.000000e+00> : vector<8x8xf32>
    %4 = vector.multi_reduction <add>, %3, %cst_5 [2] : vector<8x8x32xf32> to vector<8x8xf32>
    %5 = arith.mulf %1, %1 : vector<8x8x32xf32>
    %cst_6 = arith.constant dense<0.000000e+00> : vector<8x8xf32>
    %6 = vector.multi_reduction <add>, %5, %cst_6 [2] : vector<8x8x32xf32> to vector<8x8xf32>
    %7 = vector.shape_cast %4 : vector<8x8xf32> to vector<8x8x1xf32>
    %8 = vector.shape_cast %6 : vector<8x8xf32> to vector<8x1x8xf32>
    %9 = vector.broadcast %7 : vector<8x8x1xf32> to vector<8x8x8xf32>
    %10 = vector.broadcast %8 : vector<8x1x8xf32> to vector<8x8x8xf32>
    %11 = arith.addf %9, %10 : vector<8x8x8xf32>
    %cst_7 = arith.constant 2.000000e+00 : f32
    %12 = vector.broadcast %cst_7 : f32 to vector<8x8x8xf32>
    %13 = arith.mulf %12, %2 : vector<8x8x8xf32>
    %14 = arith.subf %11, %13 : vector<8x8x8xf32>
    %cst_8 = arith.constant 0.000000e+00 : f32
    %15 = vector.broadcast %cst_8 : f32 to vector<8x8x8xf32>
    %16 = arith.maximumf %14, %15 : vector<8x8x8xf32>
    %17 = math.sqrt %16 : vector<8x8x8xf32>
    %cst_9 = arith.constant 1.000000e+01 : f32
    %18 = vector.broadcast %cst_9 : f32 to vector<8x8x8xf32>
    %19 = arith.minimumf %17, %18 : vector<8x8x8xf32>
    %cst_10 = arith.constant 0.000000e+00 : f32
    %20 = vector.broadcast %cst_10 : f32 to vector<8x8x8xf32>
    %21 = arith.subf %20, %19 : vector<8x8x8xf32>
    %22 = math.exp %21 : vector<8x8x8xf32>
    %c8_i32 = arith.constant 8 : i32
    %23 = arith.muli %arg0, %c8_i32 : i32
    %24 = tpu.iota {dimensions = array<i32: 0>} : vector<8x8xi32>
    %25 = vector.broadcast %23 : i32 to vector<8x8xi32>
    %26 = arith.addi %24, %25 : vector<8x8xi32>
    %27 = tpu.iota {dimensions = array<i32: 1>} : vector<8x8xi32>
    %28 = arith.cmpi eq, %26, %27 : vector<8x8xi32>
    %29 = vector.shape_cast %28 : vector<8x8xi1> to vector<1x8x8xi1>
    %cst_11 = arith.constant 0.000000e+00 : f32
    %30 = vector.shape_cast %29 : vector<1x8x8xi1> to vector<1x8x8xi1>
    %31 = vector.broadcast %30 : vector<1x8x8xi1> to vector<8x8x8xi1>
    %32 = vector.broadcast %cst_11 : f32 to vector<8x8x8xf32>
    %33 = arith.select %31, %32, %22 : vector<8x8x8xi1>, vector<8x8x8xf32>
    %cst_12 = arith.constant dense<0.000000e+00> : vector<8x8xf32>
    %34 = vector.multi_reduction <add>, %33, %cst_12 [2] : vector<8x8x8xf32> to vector<8x8xf32>
    %cst_13 = arith.constant 1.000000e+00 : f32
    %35 = vector.broadcast %cst_13 : f32 to vector<8x8xf32>
    %36 = arith.addf %34, %35 : vector<8x8xf32>
    %c0_14 = arith.constant 0 : index
    %c0_15 = arith.constant 0 : index
    %37 = vector.load %arg3[%c0_14, %c0_15] : memref<8x8xf32, #tpu.memory_space<vmem>>, vector<8x8xf32>
    tpu.vector_store %arg3[%c0_14, %c0_15], %36 {strides = array<i32>} : memref<8x8xf32, #tpu.memory_space<vmem>>, vector<8x8xf32>,
    return
  }
  func.func @transform_0(%arg0: i32) -> (i32, i32, i32) {
    %c0_i32 = arith.constant 0 : i32
    %c0_i32_0 = arith.constant 0 : i32
    %c0_i32_1 = arith.constant 0 : i32
    return %c0_i32, %arg0, %c0_i32_0 : i32, i32, i32
  }
  func.func @transform_1(%arg0: i32) -> (i32, i32, i32) {
    %c0_i32 = arith.constant 0 : i32
    %c0_i32_0 = arith.constant 0 : i32
    %c0_i32_1 = arith.constant 0 : i32
    %c0_i32_2 = arith.constant 0 : i32
    return %c0_i32, %c0_i32_0, %c0_i32_1 : i32, i32, i32
  }
  func.func @transform_2(%arg0: i32) -> (i32, i32) {
    %c0_i32 = arith.constant 0 : i32
    %c0_i32_0 = arith.constant 0 : i32
    return %c0_i32, %arg0 : i32, i32
  }
}

</mosaic_0001>

<llo_original>
// kernel: minibatch_discrimination.2
$region0: #{minibatch_discrimination.2}
  #allocation0 [shape = 'u32[]', space=smem, size = 0x4, offset = 0x4, fixed_abs, tag = 'smem constant byte address 0x4 - core index']
  #allocation1 [shape = 'u32[72,128]{1,0:T(1,128)}', space=vmem, size = 0x9000, scoped, tag = 'internal scratch']
  %s0 = inlined_call_operand.vmem [shape: f32[8,16], index: 0, kind: input, shape index: {}]
  %s1 = inlined_call_operand.vmem [shape: f32[256,16], index: 1, kind: input, shape index: {}]
  %s2 = inlined_call_operand.vmem [shape: f32[8,256], index: 2, kind: output, shape index: {}]
  %s3 = sld [smem:[#allocation0]]
  $region18: #{minibatch_discrimination.2} parent=0
    _
  %s5 = ssub.s32 1, %s3
  %s6 = scalar_select 0, %s5, %s3
  // Predicated region
  $region2: #{minibatch_discrimination.2} parent=0 // pred_check
    _
  $region3: #{minibatch_discrimination.2} parent=0 // pred_check_branch
    %8 = sbr.rel (0) target = $region5
  $region4: #{minibatch_discrimination.2} parent=0 // pred_region
    _
  $region5: #{minibatch_discrimination.2} parent=0 // pred_fallthru
    _
  // Predicated region
  $region6: #{minibatch_discrimination.2} parent=0 // pred_check
    _
  $region7: #{minibatch_discrimination.2} parent=0 // pred_check_branch
    %10 = sbr.rel (0) target = $region9
  $region8: #{minibatch_discrimination.2} parent=0 // pred_region
    _
  $region9: #{minibatch_discrimination.2} parent=0 // pred_fallthru
    _
  %v11 = vld [vmem:[%s0] sm:$0xff]
  %v12 = vld [vmem:[%s1] sm:$0xff]
  %v13 = vld [vmem:[%s1 + $0x8] sm:$0xff]
  %v14 = vld [vmem:[%s1 + $0x10] sm:$0xff]
  %v15 = vld [vmem:[%s1 + $0x18] sm:$0xff]
  %v16 = vld [vmem:[%s1 + $0x20] sm:$0xff]
  %v17 = vld [vmem:[%s1 + $0x28] sm:$0xff]
  %v18 = vld [vmem:[%s1 + $0x30] sm:$0xff]
  %v19 = vld [vmem:[%s1 + $0x38] sm:$0xff]
  %v20 = vld [vmem:[%s1 + $0x40] sm:$0xff]
  %v21 = vld [vmem:[%s1 + $0x48] sm:$0xff]
  %v22 = vld [vmem:[%s1 + $0x50] sm:$0xff]
  %v23 = vld [vmem:[%s1 + $0x58] sm:$0xff]
  %v24 = vld [vmem:[%s1 + $0x60] sm:$0xff]
  %v25 = vld [vmem:[%s1 + $0x68] sm:$0xff]
  %v26 = vld [vmem:[%s1 + $0x70] sm:$0xff]
  %v27 = vld [vmem:[%s1 + $0x78] sm:$0xff]
  %v28 = vld [vmem:[%s1 + $0x80] sm:$0xff]
  %v29 = vld [vmem:[%s1 + $0x88] sm:$0xff]
  %v30 = vld [vmem:[%s1 + $0x90] sm:$0xff]
  %v31 = vld [vmem:[%s1 + $0x98] sm:$0xff]
  %v32 = vld [vmem:[%s1 + $0xa0] sm:$0xff]
  %v33 = vld [vmem:[%s1 + $0xa8] sm:$0xff]
  %v34 = vld [vmem:[%s1 + $0xb0] sm:$0xff]
  %v35 = vld [vmem:[%s1 + $0xb8] sm:$0xff]
  %v36 = vld [vmem:[%s1 + $0xc0] sm:$0xff]
  %v37 = vld [vmem:[%s1 + $0xc8] sm:$0xff]
  %v38 = vld [vmem:[%s1 + $0xd0] sm:$0xff]
  %v39 = vld [vmem:[%s1 + $0xd8] sm:$0xff]
  %v40 = vld [vmem:[%s1 + $0xe0] sm:$0xff]
  %v41 = vld [vmem:[%s1 + $0xe8] sm:$0xff]
  %v42 = vld [vmem:[%s1 + $0xf0] sm:$0xff]
  %v43 = vld [vmem:[%s1 + $0xf8] sm:$0xff]
  %vm44 = vcmask 130048
  %v46 = vsel %vm44, %v11, 0
  %v49 = vsel %vm44, %v12, 0
  %v52 = vsel %vm44, %v13, 0
  %v55 = vsel %vm44, %v14, 0
  %v58 = vsel %vm44, %v15, 0
  %v61 = vsel %vm44, %v16, 0
  %v64 = vsel %vm44, %v17, 0
  %v67 = vsel %vm44, %v18, 0
  %v70 = vsel %vm44, %v19, 0
  %v73 = vsel %vm44, %v20, 0
  %v76 = vsel %vm44, %v21, 0
  %v79 = vsel %vm44, %v22, 0
  %v82 = vsel %vm44, %v23, 0
  %v85 = vsel %vm44, %v24, 0
  %v88 = vsel %vm44, %v25, 0
  %v91 = vsel %vm44, %v26, 0
  %v94 = vsel %vm44, %v27, 0
  %v97 = vsel %vm44, %v28, 0
  %v100 = vsel %vm44, %v29, 0
  %v103 = vsel %vm44, %v30, 0
  %v106 = vsel %vm44, %v31, 0
  %v109 = vsel %vm44, %v32, 0
  %v112 = vsel %vm44, %v33, 0
  %v115 = vsel %vm44, %v34, 0
  %v118 = vsel %vm44, %v35, 0
  %v121 = vsel %vm44, %v36, 0
  %v124 = vsel %vm44, %v37, 0
  %v127 = vsel %vm44, %v38, 0
  %v130 = vsel %vm44, %v39, 0
  %v133 = vsel %vm44, %v40, 0
  %v136 = vsel %vm44, %v41, 0
  %v139 = vsel %vm44, %v42, 0
  %v142 = vsel %vm44, %v43, 0
  %v144 = vand.u32 %v94, 4294901760
  %145 = vmatpush.xpose.msra.mxu0 %v144
  %v146 = vand.u32 %v91, 4294901760
  %147 = vmatpush.xpose.msra.mxu0 %v146
  %v148 = vand.u32 %v88, 4294901760
  %149 = vmatpush.xpose.msra.mxu0 %v148
  %v150 = vand.u32 %v85, 4294901760
  %151 = vmatpush.xpose.msra.mxu0 %v150
  %v152 = vand.u32 %v82, 4294901760
  %153 = vmatpush.xpose.msra.mxu0 %v152
  %v154 = vand.u32 %v79, 4294901760
  %155 = vmatpush.xpose.msra.mxu0 %v154
  %v156 = vand.u32 %v76, 4294901760
  %157 = vmatpush.xpose.msra.mxu0 %v156
  %v158 = vand.u32 %v73, 4294901760
  %159 = vmatpush.xpose.msra.mxu0 %v158
  %v160 = vand.u32 %v70, 4294901760
  %161 = vmatpush.xpose.msra.mxu0 %v160
  %v162 = vand.u32 %v67, 4294901760
  %163 = vmatpush.xpose.msra.mxu0 %v162
  %v164 = vand.u32 %v64, 4294901760
  %165 = vmatpush.xpose.msra.mxu0 %v164
  %v166 = vand.u32 %v61, 4294901760
  %167 = vmatpush.xpose.msra.mxu0 %v166
  %v168 = vand.u32 %v58, 4294901760
  %169 = vmatpush.xpose.msra.mxu0 %v168
  %v170 = vand.u32 %v55, 4294901760
  %171 = vmatpush.xpose.msra.mxu0 %v170
  %v172 = vand.u32 %v52, 4294901760
  %173 = vmatpush.xpose.msra.mxu0 %v172
  %v174 = vand.u32 %v49, 4294901760
  %175 = vmatpush.xpose.msra.mxu0 %v174
  %v176 = vand.u32 %v46, 4294901760
  %v177 = vsub.f32 %v46, %v176
  %v178 = vand.u32 %v177, 4294901760
  %v179 = vsub.f32 %v177, %v178
  %v180 = vand.u32 %v179, 4294901760
  %181 = vmatmul.f32.gmra.mxu0 %v180
  %v182 = vpop.f32.mrf.mxu0
  %v183 = vadd.f32 0.0, %v182
  %184 = vdwg.mxu0
  %v185 = vand.u32 %v94, 4294901760
  %v186 = vsub.f32 %v94, %v185
  %v187 = vand.u32 %v186, 4294901760
  %v188 = vsub.f32 %v186, %v187
  %v189 = vand.u32 %v188, 4294901760
  %190 = vmatpush.xpose.msra.mxu0 %v189
  %v191 = vand.u32 %v91, 4294901760
  %v192 = vsub.f32 %v91, %v191
  %v193 = vand.u32 %v192, 4294901760
  %v194 = vsub.f32 %v192, %v193
  %v195 = vand.u32 %v194, 4294901760
  %196 = vmatpush.xpose.msra.mxu0 %v195
  %v197 = vand.u32 %v88, 4294901760
  %v198 = vsub.f32 %v88, %v197
  %v199 = vand.u32 %v198, 4294901760
  %v200 = vsub.f32 %v198, %v199
  %v201 = vand.u32 %v200, 4294901760
  %202 = vmatpush.xpose.msra.mxu0 %v201
  %v203 = vand.u32 %v85, 4294901760
  %v204 = vsub.f32 %v85, %v203
  %v205 = vand.u32 %v204, 4294901760
  %v206 = vsub.f32 %v204, %v205
  %v207 = vand.u32 %v206, 4294901760
  %208 = vmatpush.xpose.msra.mxu0 %v207
  %v209 = vand.u32 %v82, 4294901760
  %v210 = vsub.f32 %v82, %v209
  %v211 = vand.u32 %v210, 4294901760
  %v212 = vsub.f32 %v210, %v211
  %v213 = vand.u32 %v212, 4294901760
  %214 = vmatpush.xpose.msra.mxu0 %v213
  %v215 = vand.u32 %v79, 4294901760
  %v216 = vsub.f32 %v79, %v215
  %v217 = vand.u32 %v216, 4294901760
  %v218 = vsub.f32 %v216, %v217
  %v219 = vand.u32 %v218, 4294901760
  %220 = vmatpush.xpose.msra.mxu0 %v219
  %v221 = vand.u32 %v76, 4294901760
  %v222 = vsub.f32 %v76, %v221
  %v223 = vand.u32 %v222, 4294901760
  %v224 = vsub.f32 %v222, %v223
  %v225 = vand.u32 %v224, 4294901760
  %226 = vmatpush.xpose.msra.mxu0 %v225
  %v227 = vand.u32 %v73, 4294901760
  %v228 = vsub.f32 %v73, %v227
  %v229 = vand.u32 %v228, 4294901760
  %v230 = vsub.f32 %v228, %v229
  %v231 = vand.u32 %v230, 4294901760
  %232 = vmatpush.xpose.msra.mxu0 %v231
  %v233 = vand.u32 %v70, 4294901760
  %v234 = vsub.f32 %v70, %v233
  %v235 = vand.u32 %v234, 4294901760
  %v236 = vsub.f32 %v234, %v235
  %v237 = vand.u32 %v236, 4294901760
  %238 = vmatpush.xpose.msra.mxu0 %v237
  %v239 = vand.u32 %v67, 4294901760
  %v240 = vsub.f32 %v67, %v239
  %v241 = vand.u32 %v240, 4294901760
  %v242 = vsub.f32 %v240, %v241
  %v243 = vand.u32 %v242, 4294901760
  %244 = vmatpush.xpose.msra.mxu0 %v243
  %v245 = vand.u32 %v64, 4294901760
  %v246 = vsub.f32 %v64, %v245
  %v247 = vand.u32 %v246, 4294901760
  %v248 = vsub.f32 %v246, %v247
  %v249 = vand.u32 %v248, 4294901760
  %250 = vmatpush.xpose.msra.mxu0 %v249
  %v251 = vand.u32 %v61, 4294901760
  %v252 = vsub.f32 %v61, %v251
  %v253 = vand.u32 %v252, 4294901760
  %v254 = vsub.f32 %v252, %v253
  %v255 = vand.u32 %v254, 4294901760
  %256 = vmatpush.xpose.msra.mxu0 %v255
  %v257 = vand.u32 %v58, 4294901760
  %v258 = vsub.f32 %v58, %v257
  %v259 = vand.u32 %v258, 4294901760
  %v260 = vsub.f32 %v258, %v259
  %v261 = vand.u32 %v260, 4294901760
  %262 = vmatpush.xpose.msra.mxu0 %v261
  %v263 = vand.u32 %v55, 4294901760
  %v264 = vsub.f32 %v55, %v263
  %v265 = vand.u32 %v264, 4294901760
  %v266 = vsub.f32 %v264, %v265
  %v267 = vand.u32 %v266, 4294901760
  %268 = vmatpush.xpose.msra.mxu0 %v267
  %v269 = vand.u32 %v52, 4294901760
  %v270 = vsub.f32 %v52, %v269
  %v271 = vand.u32 %v270, 4294901760
  %v272 = vsub.f32 %v270, %v271
  %v273 = vand.u32 %v272, 4294901760
  %274 = vmatpush.xpose.msra.mxu0 %v273
  %v275 = vand.u32 %v49, 4294901760
  %v276 = vsub.f32 %v49, %v275
  %v277 = vand.u32 %v276, 4294901760
  %v278 = vsub.f32 %v276, %v277
  %v279 = vand.u32 %v278, 4294901760
  %280 = vmatpush.xpose.msra.mxu0 %v279
  %v281 = vand.u32 %v46, 4294901760
  %282 = vmatmul.f32.gmra.mxu0 %v281
  %v283 = vpop.f32.mrf.mxu0
  %v284 = vadd.f32 %v183, %v283
  %285 = vdwg.mxu0
  %v286 = vand.u32 %v94, 4294901760
  %v287 = vsub.f32 %v94, %v286
  %288 = vmatpush.xpose.msra.mxu0 %v287
  %v289 = vand.u32 %v91, 4294901760
  %v290 = vsub.f32 %v91, %v289
  %291 = vmatpush.xpose.msra.mxu0 %v290
  %v292 = vand.u32 %v88, 4294901760
  %v293 = vsub.f32 %v88, %v292
  %294 = vmatpush.xpose.msra.mxu0 %v293
  %v295 = vand.u32 %v85, 4294901760
  %v296 = vsub.f32 %v85, %v295
  %297 = vmatpush.xpose.msra.mxu0 %v296
  %v298 = vand.u32 %v82, 4294901760
  %v299 = vsub.f32 %v82, %v298
  %300 = vmatpush.xpose.msra.mxu0 %v299
  %v301 = vand.u32 %v79, 4294901760
  %v302 = vsub.f32 %v79, %v301
  %303 = vmatpush.xpose.msra.mxu0 %v302
  %v304 = vand.u32 %v76, 4294901760
  %v305 = vsub.f32 %v76, %v304
  %306 = vmatpush.xpose.msra.mxu0 %v305
  %v307 = vand.u32 %v73, 4294901760
  %v308 = vsub.f32 %v73, %v307
  %309 = vmatpush.xpose.msra.mxu0 %v308
  %v310 = vand.u32 %v70, 4294901760
  %v311 = vsub.f32 %v70, %v310
  %312 = vmatpush.xpose.msra.mxu0 %v311
  %v313 = vand.u32 %v67, 4294901760
  %v314 = vsub.f32 %v67, %v313
  %315 = vmatpush.xpose.msra.mxu0 %v314
  %v316 = vand.u32 %v64, 4294901760
  %v317 = vsub.f32 %v64, %v316
  %318 = vmatpush.xpose.msra.mxu0 %v317
  %v319 = vand.u32 %v61, 4294901760
  %v320 = vsub.f32 %v61, %v319
  %321 = vmatpush.xpose.msra.mxu0 %v320
  %v322 = vand.u32 %v58, 4294901760
  %v323 = vsub.f32 %v58, %v322
  %324 = vmatpush.xpose.msra.mxu0 %v323
  %v325 = vand.u32 %v55, 4294901760
  %v326 = vsub.f32 %v55, %v325
  %327 = vmatpush.xpose.msra.mxu0 %v326
  %v328 = vand.u32 %v52, 4294901760
  %v329 = vsub.f32 %v52, %v328
  %330 = vmatpush.xpose.msra.mxu0 %v329
  %v331 = vand.u32 %v49, 4294901760
  %v332 = vsub.f32 %v49, %v331
  %333 = vmatpush.xpose.msra.mxu0 %v332
  %v334 = vand.u32 %v46, 4294901760
  %v335 = vsub.f32 %v46, %v334
  %336 = vmatmul.f32.gmra.mxu0 %v335
  %v337 = vpop.f32.mrf.mxu0
  %v338 = vadd.f32 %v284, %v337
  %339 = vdwg.mxu0
  %v340 = vand.u32 %v94, 4294901760
  %341 = vmatpush.xpose.msra.mxu0 %v340
  %v342 = vand.u32 %v91, 4294901760
  %343 = vmatpush.xpose.msra.mxu0 %v342
  %v344 = vand.u32 %v88, 4294901760
  %345 = vmatpush.xpose.msra.mxu0 %v344
  %v346 = vand.u32 %v85, 4294901760
  %347 = vmatpush.xpose.msra.mxu0 %v346
  %v348 = vand.u32 %v82, 4294901760
  %349 = vmatpush.xpose.msra.mxu0 %v348
  %v350 = vand.u32 %v79, 4294901760
  %351 = vmatpush.xpose.msra.mxu0 %v350
  %v352 = vand.u32 %v76, 4294901760
  %353 = vmatpush.xpose.msra.mxu0 %v352
  %v354 = vand.u32 %v73, 4294901760
  %355 = vmatpush.xpose.msra.mxu0 %v354
  %v356 = vand.u32 %v70, 4294901760
  %357 = vmatpush.xpose.msra.mxu0 %v356
  %v358 = vand.u32 %v67, 4294901760
  %359 = vmatpush.xpose.msra.mxu0 %v358
  %v360 = vand.u32 %v64, 4294901760
  %361 = vmatpush.xpose.msra.mxu0 %v360
  %v362 = vand.u32 %v61, 4294901760
  %363 = vmatpush.xpose.msra.mxu0 %v362
  %v364 = vand.u32 %v58, 4294901760
  %365 = vmatpush.xpose.msra.mxu0 %v364
  %v366 = vand.u32 %v55, 4294901760
  %367 = vmatpush.xpose.msra.mxu0 %v366
  %v368 = vand.u32 %v52, 4294901760
  %369 = vmatpush.xpose.msra.mxu0 %v368
  %v370 = vand.u32 %v49, 4294901760
  %371 = vmatpush.xpose.msra.mxu0 %v370
  %v372 = vand.u32 %v46, 4294901760
  %v373 = vsub.f32 %v46, %v372
  %v374 = vand.u32 %v373, 4294901760
  %375 = vmatmul.f32.gmra.mxu0 %v374
  %v376 = vpop.f32.mrf.mxu0
  %v377 = vadd.f32 %v338, %v376
  %378 = vdwg.mxu0
  %v379 = vand.u32 %v94, 4294901760
  %v380 = vsub.f32 %v94, %v379
  %v381 = vand.u32 %v380, 4294901760
  %382 = vmatpush.xpose.msra.mxu0 %v381
  %v383 = vand.u32 %v91, 4294901760
  %v384 = vsub.f32 %v91, %v383
  %v385 = vand.u32 %v384, 4294901760
  %386 = vmatpush.xpose.msra.mxu0 %v385
  %v387 = vand.u32 %v88, 4294901760
  %v388 = vsub.f32 %v88, %v387
  %v389 = vand.u32 %v388, 4294901760
  %390 = vmatpush.xpose.msra.mxu0 %v389
  %v391 = vand.u32 %v85, 4294901760
  %v392 = vsub.f32 %v85, %v391
  %v393 = vand.u32 %v392, 4294901760
  %394 = vmatpush.xpose.msra.mxu0 %v393
  %v395 = vand.u32 %v82, 4294901760
  %v396 = vsub.f32 %v82, %v395
  %v397 = vand.u32 %v396, 4294901760
  %398 = vmatpush.xpose.msra.mxu0 %v397
  %v399 = vand.u32 %v79, 4294901760
  %v400 = vsub.f32 %v79, %v399
  %v401 = vand.u32 %v400, 4294901760
  %402 = vmatpush.xpose.msra.mxu0 %v401
  %v403 = vand.u32 %v76, 4294901760
  %v404 = vsub.f32 %v76, %v403
  %v405 = vand.u32 %v404, 4294901760
  %406 = vmatpush.xpose.msra.mxu0 %v405
  %v407 = vand.u32 %v73, 4294901760
  %v408 = vsub.f32 %v73, %v407
  %v409 = vand.u32 %v408, 4294901760
  %410 = vmatpush.xpose.msra.mxu0 %v409
  %v411 = vand.u32 %v70, 4294901760
  %v412 = vsub.f32 %v70, %v411
  %v413 = vand.u32 %v412, 4294901760
  %414 = vmatpush.xpose.msra.mxu0 %v413
  %v415 = vand.u32 %v67, 4294901760
  %v416 = vsub.f32 %v67, %v415
  %v417 = vand.u32 %v416, 4294901760
  %418 = vmatpush.xpose.msra.mxu0 %v417
  %v419 = vand.u32 %v64, 4294901760
  %v420 = vsub.f32 %v64, %v419
  %v421 = vand.u32 %v420, 4294901760
  %422 = vmatpush.xpose.msra.mxu0 %v421
  %v423 = vand.u32 %v61, 4294901760
  %v424 = vsub.f32 %v61, %v423
  %v425 = vand.u32 %v424, 4294901760
  %426 = vmatpush.xpose.msra.mxu0 %v425
  %v427 = vand.u32 %v58, 4294901760
  %v428 = vsub.f32 %v58, %v427
  %v429 = vand.u32 %v428, 4294901760
  %430 = vmatpush.xpose.msra.mxu0 %v429
  %v431 = vand.u32 %v55, 4294901760
  %v432 = vsub.f32 %v55, %v431
  %v433 = vand.u32 %v432, 4294901760
  %434 = vmatpush.xpose.msra.mxu0 %v433
  %v435 = vand.u32 %v52, 4294901760
  %v436 = vsub.f32 %v52, %v435
  %v437 = vand.u32 %v436, 4294901760
  %438 = vmatpush.xpose.msra.mxu0 %v437
  %v439 = vand.u32 %v49, 4294901760
  %v440 = vsub.f32 %v49, %v439
  %v441 = vand.u32 %v440, 4294901760
  %442 = vmatpush.xpose.msra.mxu0 %v441
  %v443 = vand.u32 %v46, 4294901760
  %444 = vmatmul.f32.gmra.mxu0 %v443
  %v445 = vpop.f32.mrf.mxu0
  %v446 = vadd.f32 %v377, %v445
  %447 = vdwg.mxu0
  %v448 = vand.u32 %v94, 4294901760
  %449 = vmatpush.xpose.msra.mxu0 %v448
  %v450 = vand.u32 %v91, 4294901760
  %451 = vmatpush.xpose.msra.mxu0 %v450
  %v452 = vand.u32 %v88, 4294901760
  %453 = vmatpush.xpose.msra.mxu0 %v452
  %v454 = vand.u32 %v85, 4294901760
  %455 = vmatpush.xpose.msra.mxu0 %v454
  %v456 = vand.u32 %v82, 4294901760
  %457 = vmatpush.xpose.msra.mxu0 %v456
  %v458 = vand.u32 %v79, 4294901760
  %459 = vmatpush.xpose.msra.mxu0 %v458
  %v460 = vand.u32 %v76, 4294901760
  %461 = vmatpush.xpose.msra.mxu0 %v460
  %v462 = vand.u32 %v73, 4294901760
  %463 = vmatpush.xpose.msra.mxu0 %v462
  %v464 = vand.u32 %v70, 4294901760
  %465 = vmatpush.xpose.msra.mxu0 %v464
  %v466 = vand.u32 %v67, 4294901760
  %467 = vmatpush.xpose.msra.mxu0 %v466
  %v468 = vand.u32 %v64, 4294901760
  %469 = vmatpush.xpose.msra.mxu0 %v468
  %v470 = vand.u32 %v61, 4294901760
  %471 = vmatpush.xpose.msra.mxu0 %v470
  %v472 = vand.u32 %v58, 4294901760
  %473 = vmatpush.xpose.msra.mxu0 %v472
  %v474 = vand.u32 %v55, 4294901760
  %475 = vmatpush.xpose.msra.mxu0 %v474
  %v476 = vand.u32 %v52, 4294901760
  %477 = vmatpush.xpose.msra.mxu0 %v476
  %v478 = vand.u32 %v49, 4294901760
  %479 = vmatpush.xpose.msra.mxu0 %v478
  %v480 = vand.u32 %v46, 4294901760
  %481 = vmatmul.f32.gmra.mxu0 %v480
  %v482 = vpop.f32.mrf.mxu0
  %v483 = vadd.f32 %v446, %v482
  %484 = vdwg.mxu0
  %v485 = vand.u32 %v142, 4294901760
  %486 = vmatpush.xpose.msra.mxu0 %v485
  %v487 = vand.u32 %v139, 4294901760
  %488 = vmatpush.xpose.msra.mxu0 %v487
  %v489 = vand.u32 %v136, 4294901760
  %490 = vmatpush.xpose.msra.mxu0 %v489
  %v491 = vand.u32 %v133, 4294901760
  %492 = vmatpush.xpose.msra.mxu0 %v491
  %v493 = vand.u32 %v130, 4294901760
  %494 = vmatpush.xpose.msra.mxu0 %v493
  %v495 = vand.u32 %v127, 4294901760
  %496 = vmatpush.xpose.msra.mxu0 %v495
  %v497 = vand.u32 %v124, 4294901760
  %498 = vmatpush.xpose.msra.mxu0 %v497
  %v499 = vand.u32 %v121, 4294901760
  %500 = vmatpush.xpose.msra.mxu0 %v499
  %v501 = vand.u32 %v118, 4294901760
  %502 = vmatpush.xpose.msra.mxu0 %v501
  %v503 = vand.u32 %v115, 4294901760
  %504 = vmatpush.xpose.msra.mxu0 %v503
  %v505 = vand.u32 %v112, 4294901760
  %506 = vmatpush.xpose.msra.mxu0 %v505
  %v507 = vand.u32 %v109, 4294901760
  %508 = vmatpush.xpose.msra.mxu0 %v507
  %v509 = vand.u32 %v106, 4294901760
  %510 = vmatpush.xpose.msra.mxu0 %v509
  %v511 = vand.u32 %v103, 4294901760
  %512 = vmatpush.xpose.msra.mxu0 %v511
  %v513 = vand.u32 %v100, 4294901760
  %514 = vmatpush.xpose.msra.mxu0 %v513
  %v515 = vand.u32 %v97, 4294901760
  %516 = vmatpush.xpose.msra.mxu0 %v515
  %v517 = vand.u32 %v46, 4294901760
  %v518 = vsub.f32 %v46, %v517
  %v519 = vand.u32 %v518, 4294901760
  %v520 = vsub.f32 %v518, %v519
  %v521 = vand.u32 %v520, 4294901760
  %522 = vmatmul.f32.gmra.mxu0 %v521
  %v523 = vpop.f32.mrf.mxu0
  %v524 = vadd.f32 0.0, %v523
  %525 = vdwg.mxu0
  %v526 = vand.u32 %v142, 4294901760
  %v527 = vsub.f32 %v142, %v526
  %v528 = vand.u32 %v527, 4294901760
  %v529 = vsub.f32 %v527, %v528
  %v530 = vand.u32 %v529, 4294901760
  %531 = vmatpush.xpose.msra.mxu0 %v530
  %v532 = vand.u32 %v139, 4294901760
  %v533 = vsub.f32 %v139, %v532
  %v534 = vand.u32 %v533, 4294901760
  %v535 = vsub.f32 %v533, %v534
  %v536 = vand.u32 %v535, 4294901760
  %537 = vmatpush.xpose.msra.mxu0 %v536
  %v538 = vand.u32 %v136, 4294901760
  %v539 = vsub.f32 %v136, %v538
  %v540 = vand.u32 %v539, 4294901760
  %v541 = vsub.f32 %v539, %v540
  %v542 = vand.u32 %v541, 4294901760
  %543 = vmatpush.xpose.msra.mxu0 %v542
  %v544 = vand.u32 %v133, 4294901760
  %v545 = vsub.f32 %v133, %v544
  %v546 = vand.u32 %v545, 4294901760
  %v547 = vsub.f32 %v545, %v546
  %v548 = vand.u32 %v547, 4294901760
  %549 = vmatpush.xpose.msra.mxu0 %v548
  %v550 = vand.u32 %v130, 4294901760
  %v551 = vsub.f32 %v130, %v550
  %v552 = vand.u32 %v551, 4294901760
  %v553 = vsub.f32 %v551, %v552
  %v554 = vand.u32 %v553, 4294901760
  %555 = vmatpush.xpose.msra.mxu0 %v554
  %v556 = vand.u32 %v127, 4294901760
  %v557 = vsub.f32 %v127, %v556
  %v558 = vand.u32 %v557, 4294901760
  %v559 = vsub.f32 %v557, %v558
  %v560 = vand.u32 %v559, 4294901760
  %561 = vmatpush.xpose.msra.mxu0 %v560
  %v562 = vand.u32 %v124, 4294901760
  %v563 = vsub.f32 %v124, %v562
  %v564 = vand.u32 %v563, 4294901760
  %v565 = vsub.f32 %v563, %v564
  %v566 = vand.u32 %v565, 4294901760
  %567 = vmatpush.xpose.msra.mxu0 %v566
  %v568 = vand.u32 %v121, 4294901760
  %v569 = vsub.f32 %v121, %v568
  %v570 = vand.u32 %v569, 4294901760
  %v571 = vsub.f32 %v569, %v570
  %v572 = vand.u32 %v571, 4294901760
  %573 = vmatpush.xpose.msra.mxu0 %v572
  %v574 = vand.u32 %v118, 4294901760
  %v575 = vsub.f32 %v118, %v574
  %v576 = vand.u32 %v575, 4294901760
  %v577 = vsub.f32 %v575, %v576
  %v578 = vand.u32 %v577, 4294901760
  %579 = vmatpush.xpose.msra.mxu0 %v578
  %v580 = vand.u32 %v115, 4294901760
  %v581 = vsub.f32 %v115, %v580
  %v582 = vand.u32 %v581, 4294901760
  %v583 = vsub.f32 %v581, %v582
  %v584 = vand.u32 %v583, 4294901760
  %585 = vmatpush.xpose.msra.mxu0 %v584
  %v586 = vand.u32 %v112, 4294901760
  %v587 = vsub.f32 %v112, %v586
  %v588 = vand.u32 %v587, 4294901760
  %v589 = vsub.f32 %v587, %v588
  %v590 = vand.u32 %v589, 4294901760
  %591 = vmatpush.xpose.msra.mxu0 %v590
  %v592 = vand.u32 %v109, 4294901760
  %v593 = vsub.f32 %v109, %v592
  %v594 = vand.u32 %v593, 4294901760
  %v595 = vsub.f32 %v593, %v594
  %v596 = vand.u32 %v595, 4294901760
  %597 = vmatpush.xpose.msra.mxu0 %v596
  %v598 = vand.u32 %v106, 4294901760
  %v599 = vsub.f32 %v106, %v598
  %v600 = vand.u32 %v599, 4294901760
  %v601 = vsub.f32 %v599, %v600
  %v602 = vand.u32 %v601, 4294901760
  %603 = vmatpush.xpose.msra.mxu0 %v602
  %v604 = vand.u32 %v103, 4294901760
  %v605 = vsub.f32 %v103, %v604
  %v606 = vand.u32 %v605, 4294901760
  %v607 = vsub.f32 %v605, %v606
  %v608 = vand.u32 %v607, 4294901760
  %609 = vmatpush.xpose.msra.mxu0 %v608
  %v610 = vand.u32 %v100, 4294901760
  %v611 = vsub.f32 %v100, %v610
  %v612 = vand.u32 %v611, 4294901760
  %v613 = vsub.f32 %v611, %v612
  %v614 = vand.u32 %v613, 4294901760
  %615 = vmatpush.xpose.msra.mxu0 %v614
  %v616 = vand.u32 %v97, 4294901760
  %v617 = vsub.f32 %v97, %v616
  %v618 = vand.u32 %v617, 4294901760
  %v619 = vsub.f32 %v617, %v618
  %v620 = vand.u32 %v619, 4294901760
  %621 = vmatpush.xpose.msra.mxu0 %v620
  %v622 = vand.u32 %v46, 4294901760
  %623 = vmatmul.f32.gmra.mxu0 %v622
  %v624 = vpop.f32.mrf.mxu0
  %v625 = vadd.f32 %v524, %v624
  %626 = vdwg.mxu0
  %v627 = vand.u32 %v142, 4294901760
  %v628 = vsub.f32 %v142, %v627
  %629 = vmatpush.xpose.msra.mxu0 %v628
  %v630 = vand.u32 %v139, 4294901760
  %v631 = vsub.f32 %v139, %v630
  %632 = vmatpush.xpose.msra.mxu0 %v631
  %v633 = vand.u32 %v136, 4294901760
  %v634 = vsub.f32 %v136, %v633
  %635 = vmatpush.xpose.msra.mxu0 %v634
  %v636 = vand.u32 %v133, 4294901760
  %v637 = vsub.f32 %v133, %v636
  %638 = vmatpush.xpose.msra.mxu0 %v637
  %v639 = vand.u32 %v130, 4294901760
  %v640 = vsub.f32 %v130, %v639
  %641 = vmatpush.xpose.msra.mxu0 %v640
  %v642 = vand.u32 %v127, 4294901760
  %v643 = vsub.f32 %v127, %v642
  %644 = vmatpush.xpose.msra.mxu0 %v643
  %v645 = vand.u32 %v124, 4294901760
  %v646 = vsub.f32 %v124, %v645
  %647 = vmatpush.xpose.msra.mxu0 %v646
  %v648 = vand.u32 %v121, 4294901760
  %v649 = vsub.f32 %v121, %v648
  %650 = vmatpush.xpose.msra.mxu0 %v649
  %v651 = vand.u32 %v118, 4294901760
  %v652 = vsub.f32 %v118, %v651
  %653 = vmatpush.xpose.msra.mxu0 %v652
  %v654 = vand.u32 %v115, 4294901760
  %v655 = vsub.f32 %v115, %v654
  %656 = vmatpush.xpose.msra.mxu0 %v655
  %v657 = vand.u32 %v112, 4294901760
  %v658 = vsub.f32 %v112, %v657
  %659 = vmatpush.xpose.msra.mxu0 %v658
  %v660 = vand.u32 %v109, 4294901760
  %v661 = vsub.f32 %v109, %v660
  %662 = vmatpush.xpose.msra.mxu0 %v661
  %v663 = vand.u32 %v106, 4294901760
  %v664 = vsub.f32 %v106, %v663
  %665 = vmatpush.xpose.msra.mxu0 %v664
  %v666 = vand.u32 %v103, 4294901760
  %v667 = vsub.f32 %v103, %v666
  %668 = vmatpush.xpose.msra.mxu0 %v667
  %v669 = vand.u32 %v100, 4294901760
  %v670 = vsub.f32 %v100, %v669
  %671 = vmatpush.xpose.msra.mxu0 %v670
  %v672 = vand.u32 %v97, 4294901760
  %v673 = vsub.f32 %v97, %v672
  %674 = vmatpush.xpose.msra.mxu0 %v673
  %v675 = vand.u32 %v46, 4294901760
  %v676 = vsub.f32 %v46, %v675
  %677 = vmatmul.f32.gmra.mxu0 %v676
  %v678 = vpop.f32.mrf.mxu0
  %v679 = vadd.f32 %v625, %v678
  %680 = vdwg.mxu0
  %v681 = vand.u32 %v142, 4294901760
  %682 = vmatpush.xpose.msra.mxu0 %v681
  %v683 = vand.u32 %v139, 4294901760
  %684 = vmatpush.xpose.msra.mxu0 %v683
  %v685 = vand.u32 %v136, 4294901760
  %686 = vmatpush.xpose.msra.mxu0 %v685
  %v687 = vand.u32 %v133, 4294901760
  %688 = vmatpush.xpose.msra.mxu0 %v687
  %v689 = vand.u32 %v130, 4294901760
  %690 = vmatpush.xpose.msra.mxu0 %v689
  %v691 = vand.u32 %v127, 4294901760
  %692 = vmatpush.xpose.msra.mxu0 %v691
  %v693 = vand.u32 %v124, 4294901760
  %694 = vmatpush.xpose.msra.mxu0 %v693
  %v695 = vand.u32 %v121, 4294901760
  %696 = vmatpush.xpose.msra.mxu0 %v695
  %v697 = vand.u32 %v118, 4294901760
  %698 = vmatpush.xpose.msra.mxu0 %v697
  %v699 = vand.u32 %v115, 4294901760
  %700 = vmatpush.xpose.msra.mxu0 %v699
  %v701 = vand.u32 %v112, 4294901760
  %702 = vmatpush.xpose.msra.mxu0 %v701
  %v703 = vand.u32 %v109, 4294901760
  %704 = vmatpush.xpose.msra.mxu0 %v703
  %v705 = vand.u32 %v106, 4294901760
  %706 = vmatpush.xpose.msra.mxu0 %v705
  %v707 = vand.u32 %v103, 4294901760
  %708 = vmatpush.xpose.msra.mxu0 %v707
  %v709 = vand.u32 %v100, 4294901760
  %710 = vmatpush.xpose.msra.mxu0 %v709
  %v711 = vand.u32 %v97, 4294901760
  %712 = vmatpush.xpose.msra.mxu0 %v711
  %v713 = vand.u32 %v46, 4294901760
  %v714 = vsub.f32 %v46, %v713
  %v715 = vand.u32 %v714, 4294901760
  %716 = vmatmul.f32.gmra.mxu0 %v715
  %v717 = vpop.f32.mrf.mxu0
  %v718 = vadd.f32 %v679, %v717
  %719 = vdwg.mxu0
  %v720 = vand.u32 %v142, 4294901760
  %v721 = vsub.f32 %v142, %v720
  %v722 = vand.u32 %v721, 4294901760
  %723 = vmatpush.xpose.msra.mxu0 %v722
  %v724 = vand.u32 %v139, 4294901760
  %v725 = vsub.f32 %v139, %v724
  %v726 = vand.u32 %v725, 4294901760
  %727 = vmatpush.xpose.msra.mxu0 %v726
  %v728 = vand.u32 %v136, 4294901760
  %v729 = vsub.f32 %v136, %v728
  %v730 = vand.u32 %v729, 4294901760
  %731 = vmatpush.xpose.msra.mxu0 %v730
  %v732 = vand.u32 %v133, 4294901760
  %v733 = vsub.f32 %v133, %v732
  %v734 = vand.u32 %v733, 4294901760
  %735 = vmatpush.xpose.msra.mxu0 %v734
  %v736 = vand.u32 %v130, 4294901760
  %v737 = vsub.f32 %v130, %v736
  %v738 = vand.u32 %v737, 4294901760
  %739 = vmatpush.xpose.msra.mxu0 %v738
  %v740 = vand.u32 %v127, 4294901760
  %v741 = vsub.f32 %v127, %v740
  %v742 = vand.u32 %v741, 4294901760
  %743 = vmatpush.xpose.msra.mxu0 %v742
  %v744 = vand.u32 %v124, 4294901760
  %v745 = vsub.f32 %v124, %v744
  %v746 = vand.u32 %v745, 4294901760
  %747 = vmatpush.xpose.msra.mxu0 %v746
  %v748 = vand.u32 %v121, 4294901760
  %v749 = vsub.f32 %v121, %v748
  %v750 = vand.u32 %v749, 4294901760
  %751 = vmatpush.xpose.msra.mxu0 %v750
  %v752 = vand.u32 %v118, 4294901760
  %v753 = vsub.f32 %v118, %v752
  %v754 = vand.u32 %v753, 4294901760
  %755 = vmatpush.xpose.msra.mxu0 %v754
  %v756 = vand.u32 %v115, 4294901760
  %v757 = vsub.f32 %v115, %v756
  %v758 = vand.u32 %v757, 4294901760
  %759 = vmatpush.xpose.msra.mxu0 %v758
  %v760 = vand.u32 %v112, 4294901760
  %v761 = vsub.f32 %v112, %v760
  %v762 = vand.u32 %v761, 4294901760
  %763 = vmatpush.xpose.msra.mxu0 %v762
  %v764 = vand.u32 %v109, 4294901760
  %v765 = vsub.f32 %v109, %v764
  %v766 = vand.u32 %v765, 4294901760
  %767 = vmatpush.xpose.msra.mxu0 %v766
  %v768 = vand.u32 %v106, 4294901760
  %v769 = vsub.f32 %v106, %v768
  %v770 = vand.u32 %v769, 4294901760
  %771 = vmatpush.xpose.msra.mxu0 %v770
  %v772 = vand.u32 %v103, 4294901760
  %v773 = vsub.f32 %v103, %v772
  %v774 = vand.u32 %v773, 4294901760
  %775 = vmatpush.xpose.msra.mxu0 %v774
  %v776 = vand.u32 %v100, 4294901760
  %v777 = vsub.f32 %v100, %v776
  %v778 = vand.u32 %v777, 4294901760
  %779 = vmatpush.xpose.msra.mxu0 %v778
  %v780 = vand.u32 %v97, 4294901760
  %v781 = vsub.f32 %v97, %v780
  %v782 = vand.u32 %v781, 4294901760
  %783 = vmatpush.xpose.msra.mxu0 %v782
  %v784 = vand.u32 %v46, 4294901760
  %785 = vmatmul.f32.gmra.mxu0 %v784
  %v786 = vpop.f32.mrf.mxu0
  %v787 = vadd.f32 %v718, %v786
  %788 = vdwg.mxu0
  %v789 = vand.u32 %v142, 4294901760
  %790 = vmatpush.xpose.msra.mxu0 %v789
  %v791 = vand.u32 %v139, 4294901760
  %792 = vmatpush.xpose.msra.mxu0 %v791
  %v793 = vand.u32 %v136, 4294901760
  %794 = vmatpush.xpose.msra.mxu0 %v793
  %v795 = vand.u32 %v133, 4294901760
  %796 = vmatpush.xpose.msra.mxu0 %v795
  %v797 = vand.u32 %v130, 4294901760
  %798 = vmatpush.xpose.msra.mxu0 %v797
  %v799 = vand.u32 %v127, 4294901760
  %800 = vmatpush.xpose.msra.mxu0 %v799
  %v801 = vand.u32 %v124, 4294901760
  %802 = vmatpush.xpose.msra.mxu0 %v801
  %v803 = vand.u32 %v121, 4294901760
  %804 = vmatpush.xpose.msra.mxu0 %v803
  %v805 = vand.u32 %v118, 4294901760
  %806 = vmatpush.xpose.msra.mxu0 %v805
  %v807 = vand.u32 %v115, 4294901760
  %808 = vmatpush.xpose.msra.mxu0 %v807
  %v809 = vand.u32 %v112, 4294901760
  %810 = vmatpush.xpose.msra.mxu0 %v809
  %v811 = vand.u32 %v109, 4294901760
  %812 = vmatpush.xpose.msra.mxu0 %v811
  %v813 = vand.u32 %v106, 4294901760
  %814 = vmatpush.xpose.msra.mxu0 %v813
  %v815 = vand.u32 %v103, 4294901760
  %816 = vmatpush.xpose.msra.mxu0 %v815
  %v817 = vand.u32 %v100, 4294901760
  %818 = vmatpush.xpose.msra.mxu0 %v817
  %v819 = vand.u32 %v97, 4294901760
  %820 = vmatpush.xpose.msra.mxu0 %v819
  %v821 = vand.u32 %v46, 4294901760
  %822 = vmatmul.f32.gmra.mxu0 %v821
  %v823 = vpop.f32.mrf.mxu0
  %v824 = vadd.f32 %v787, %v823
  %825 = vdwg.mxu0
  %826 = vst [vmem:[%s2] sm:$0xff] %v483
  %827 = vst [vmem:[%s2 + $0x8] sm:$0xff] %v824
  // Predicated region
  $region10: #{minibatch_discrimination.2} parent=0 // pred_check
    _
  $region11: #{minibatch_discrimination.2} parent=0 // pred_check_branch
    %829 = sbr.rel (0) target = $region13
  $region12: #{minibatch_discrimination.2} parent=0 // pred_region
    _
  $region13: #{minibatch_discrimination.2} parent=0 // pred_fallthru
    _
  // Predicated region
  $region14: #{minibatch_discrimination.2} parent=0 // pred_check
    _
  $region15: #{minibatch_discrimination.2} parent=0 // pred_check_branch
    %831 = sbr.rel (0) target = $region17
  $region16: #{minibatch_discrimination.2} parent=0 // pred_region
    _
  $region17: #{minibatch_discrimination.2} parent=0 // pred_fallthru
    _

// kernel: minibatch_discrimination.3
$region0: #{minibatch_discrimination.3}
  #allocation0 [shape = 'u32[]', space=smem, size = 0x4, offset = 0x4, fixed_abs, tag = 'smem constant byte address 0x4 - core index']
  #allocation1 [shape = 'u32[72,128]{1,0:T(1,128)}', space=vmem, size = 0x9000, scoped, tag = 'internal scratch']
  %s0 = inlined_call_operand.vmem [shape: f32[8,8,32], index: 0, kind: input, shape index: {}, may-alias: {0,1}]
  %s1 = inlined_call_operand.vmem [shape: f32[8,8,32], index: 1, kind: input, shape index: {}, may-alias: {0,1}]
  %s2 = inlined_call_operand.vmem [shape: f32[8,8], index: 2, kind: output, shape index: {}]
  %s3 = sld [smem:[#allocation0]]
  $region18: #{minibatch_discrimination.3} parent=0
    _
  %s5 = ssub.s32 1, %s3
  %s6 = scalar_select 0, %s5, %s3
  // Predicated region
  $region2: #{minibatch_discrimination.3} parent=0 // pred_check
    _
  $region3: #{minibatch_discrimination.3} parent=0 // pred_check_branch
    %8 = sbr.rel (0) target = $region5
  $region4: #{minibatch_discrimination.3} parent=0 // pred_region
    _
  $region5: #{minibatch_discrimination.3} parent=0 // pred_fallthru
    _
  // Predicated region
  $region6: #{minibatch_discrimination.3} parent=0 // pred_check
    _
  $region7: #{minibatch_discrimination.3} parent=0 // pred_check_branch
    %10 = sbr.rel (0) target = $region9
  $region8: #{minibatch_discrimination.3} parent=0 // pred_region
    _
  $region9: #{minibatch_discrimination.3} parent=0 // pred_fallthru
    _
  %v11 = vld [vmem:[%s0] sm:$0xff]
  %v12 = vld [vmem:[%s0 + $0x8] sm:$0xff]
  %v13 = vld [vmem:[%s0 + $0x10] sm:$0xff]
  %v14 = vld [vmem:[%s0 + $0x18] sm:$0xff]
  %v15 = vld [vmem:[%s0 + $0x20] sm:$0xff]
  %v16 = vld [vmem:[%s0 + $0x28] sm:$0xff]
  %v17 = vld [vmem:[%s0 + $0x30] sm:$0xff]
  %v18 = vld [vmem:[%s0 + $0x38] sm:$0xff]
  %v19 = vld [vmem:[%s1] sm:$0xff]
  %v20 = vld [vmem:[%s1 + $0x8] sm:$0xff]
  %v21 = vld [vmem:[%s1 + $0x10] sm:$0xff]
  %v22 = vld [vmem:[%s1 + $0x18] sm:$0xff]
  %v23 = vld [vmem:[%s1 + $0x20] sm:$0xff]
  %v24 = vld [vmem:[%s1 + $0x28] sm:$0xff]
  %v25 = vld [vmem:[%s1 + $0x30] sm:$0xff]
  %v26 = vld [vmem:[%s1 + $0x38] sm:$0xff]
  %vm27 = vcmask 261120
  %v29 = vsel %vm27, %v11, 0
  %v32 = vsel %vm27, %v19, 0
  %34 = vmatpush.xpose.msra.mxu0 0.0
  %35 = vmatpush.xpose.msra.mxu0 0.0
  %36 = vmatpush.xpose.msra.mxu0 0.0
  %37 = vmatpush.xpose.msra.mxu0 0.0
  %38 = vmatpush.xpose.msra.mxu0 0.0
  %39 = vmatpush.xpose.msra.mxu0 0.0
  %40 = vmatpush.xpose.msra.mxu0 0.0
  %41 = vmatpush.xpose.msra.mxu0 0.0
  %42 = vmatpush.xpose.msra.mxu0 0.0
  %43 = vmatpush.xpose.msra.mxu0 0.0
  %44 = vmatpush.xpose.msra.mxu0 0.0
  %45 = vmatpush.xpose.msra.mxu0 0.0
  %46 = vmatpush.xpose.msra.mxu0 0.0
  %47 = vmatpush.xpose.msra.mxu0 0.0
  %48 = vmatpush.xpose.msra.mxu0 0.0
  %v49 = vand.u32 %v32, 4294901760
  %50 = vmatpush.xpose.msra.mxu0 %v49
  %v51 = vand.u32 %v29, 4294901760
  %v52 = vsub.f32 %v29, %v51
  %v53 = vand.u32 %v52, 4294901760
  %v54 = vsub.f32 %v52, %v53
  %v55 = vand.u32 %v54, 4294901760
  %56 = vmatmul.f32.gmra.mxu0 %v55
  %v57 = vpop.f32.mrf.mxu0
  %v58 = vadd.f32 0.0, %v57
  %59 = vdwg.mxu0
  %60 = vmatpush.xpose.msra.mxu0 0.0
  %61 = vmatpush.xpose.msra.mxu0 0.0
  %62 = vmatpush.xpose.msra.mxu0 0.0
  %63 = vmatpush.xpose.msra.mxu0 0.0
  %64 = vmatpush.xpose.msra.mxu0 0.0
  %65 = vmatpush.xpose.msra.mxu0 0.0
  %66 = vmatpush.xpose.msra.mxu0 0.0
  %67 = vmatpush.xpose.msra.mxu0 0.0
  %68 = vmatpush.xpose.msra.mxu0 0.0
  %69 = vmatpush.xpose.msra.mxu0 0.0
  %70 = vmatpush.xpose.msra.mxu0 0.0
  %71 = vmatpush.xpose.msra.mxu0 0.0
  %72 = vmatpush.xpose.msra.mxu0 0.0
  %73 = vmatpush.xpose.msra.mxu0 0.0
  %74 = vmatpush.xpose.msra.mxu0 0.0
  %v75 = vand.u32 %v32, 4294901760
  %v76 = vsub.f32 %v32, %v75
  %v77 = vand.u32 %v76, 4294901760
  %v78 = vsub.f32 %v76, %v77
  %v79 = vand.u32 %v78, 4294901760
  %80 = vmatpush.xpose.msra.mxu0 %v79
  %v81 = vand.u32 %v29, 4294901760
  %82 = vmatmul.f32.gmra.mxu0 %v81
  %v83 = vpop.f32.mrf.mxu0
  %v84 = vadd.f32 %v58, %v83
  %85 = vdwg.mxu0
  %86 = vmatpush.xpose.msra.mxu0 0.0
  %87 = vmatpush.xpose.msra.mxu0 0.0
  %88 = vmatpush.xpose.msra.mxu0 0.0
  %89 = vmatpush.xpose.msra.mxu0 0.0
  %90 = vmatpush.xpose.msra.mxu0 0.0
  %91 = vmatpush.xpose.msra.mxu0 0.0
  %92 = vmatpush.xpose.msra.mxu0 0.0
  %93 = vmatpush.xpose.msra.mxu0 0.0
  %94 = vmatpush.xpose.msra.mxu0 0.0
  %95 = vmatpush.xpose.msra.mxu0 0.0
  %96 = vmatpush.xpose.msra.mxu0 0.0
  %97 = vmatpush.xpose.msra.mxu0 0.0
  %98 = vmatpush.xpose.msra.mxu0 0.0
  %99 = vmatpush.xpose.msra.mxu0 0.0
  %100 = vmatpush.xpose.msra.mxu0 0.0
  %v101 = vand.u32 %v32, 4294901760
  %v102 = vsub.f32 %v32, %v101
  %103 = vmatpush.xpose.msra.mxu0 %v102
  %v104 = vand.u32 %v29, 4294901760
  %v105 = vsub.f32 %v29, %v104
  %106 = vmatmul.f32.gmra.mxu0 %v105
  %v107 = vpop.f32.mrf.mxu0
  %v108 = vadd.f32 %v84, %v107
  %109 = vdwg.mxu0
  %110 = vmatpush.xpose.msra.mxu0 0.0
  %111 = vmatpush.xpose.msra.mxu0 0.0
  %112 = vmatpush.xpose.msra.mxu0 0.0
  %113 = vmatpush.xpose.msra.mxu0 0.0
  %114 = vmatpush.xpose.msra.mxu0 0.0
  %115 = vmatpush.xpose.msra.mxu0 0.0
  %116 = vmatpush.xpose.msra.mxu0 0.0
  %117 = vmatpush.xpose.msra.mxu0 0.0
  %118 = vmatpush.xpose.msra.mxu0 0.0
  %119 = vmatpush.xpose.msra.mxu0 0.0
  %120 = vmatpush.xpose.msra.mxu0 0.0
  %121 = vmatpush.xpose.msra.mxu0 0.0
  %122 = vmatpush.xpose.msra.mxu0 0.0
  %123 = vmatpush.xpose.msra.mxu0 0.0
  %124 = vmatpush.xpose.msra.mxu0 0.0
  %v125 = vand.u32 %v32, 4294901760
  %126 = vmatpush.xpose.msra.mxu0 %v125
  %v127 = vand.u32 %v29, 4294901760
  %v128 = vsub.f32 %v29, %v127
  %v129 = vand.u32 %v128, 4294901760
  %130 = vmatmul.f32.gmra.mxu0 %v129
  %v131 = vpop.f32.mrf.mxu0
  %v132 = vadd.f32 %v108, %v131
  %133 = vdwg.mxu0
  %134 = vmatpush.xpose.msra.mxu0 0.0
  %135 = vmatpush.xpose.msra.mxu0 0.0
  %136 = vmatpush.xpose.msra.mxu0 0.0
  %137 = vmatpush.xpose.msra.mxu0 0.0
  %138 = vmatpush.xpose.msra.mxu0 0.0
  %139 = vmatpush.xpose.msra.mxu0 0.0
  %140 = vmatpush.xpose.msra.mxu0 0.0
  %141 = vmatpush.xpose.msra.mxu0 0.0
  %142 = vmatpush.xpose.msra.mxu0 0.0
  %143 = vmatpush.xpose.msra.mxu0 0.0
  %144 = vmatpush.xpose.msra.mxu0 0.0
  %145 = vmatpush.xpose.msra.mxu0 0.0
  %146 = vmatpush.xpose.msra.mxu0 0.0
  %147 = vmatpush.xpose.msra.mxu0 0.0
  %148 = vmatpush.xpose.msra.mxu0 0.0
  %v149 = vand.u32 %v32, 4294901760
  %v150 = vsub.f32 %v32, %v149
  %v151 = vand.u32 %v150, 4294901760
  %152 = vmatpush.xpose.msra.mxu0 %v151
  %v153 = vand.u32 %v29, 4294901760
  %154 = vmatmul.f32.gmra.mxu0 %v153
  %v155 = vpop.f32.mrf.mxu0
  %v156 = vadd.f32 %v132, %v155
  %157 = vdwg.mxu0
  %158 = vmatpush.xpose.msra.mxu0 0.0
  %159 = vmatpush.xpose.msra.mxu0 0.0
  %160 = vmatpush.xpose.msra.mxu0 0.0
  %161 = vmatpush.xpose.msra.mxu0 0.0
  %162 = vmatpush.xpose.msra.mxu0 0.0
  %163 = vmatpush.xpose.msra.mxu0 0.0
  %164 = vmatpush.xpose.msra.mxu0 0.0
  %165 = vmatpush.xpose.msra.mxu0 0.0
  %166 = vmatpush.xpose.msra.mxu0 0.0
  %167 = vmatpush.xpose.msra.mxu0 0.0
  %168 = vmatpush.xpose.msra.mxu0 0.0
  %169 = vmatpush.xpose.msra.mxu0 0.0
  %170 = vmatpush.xpose.msra.mxu0 0.0
  %171 = vmatpush.xpose.msra.mxu0 0.0
  %172 = vmatpush.xpose.msra.mxu0 0.0
  %v173 = vand.u32 %v32, 4294901760
  %174 = vmatpush.xpose.msra.mxu0 %v173
  %v175 = vand.u32 %v29, 4294901760
  %176 = vmatmul.f32.gmra.mxu0 %v175
  %v177 = vpop.f32.mrf.mxu0
  %v178 = vadd.f32 %v156, %v177
  %179 = vdwg.mxu0
  %v181 = vsel %vm27, %v12, 0
  %v184 = vsel %vm27, %v20, 0
  %186 = vmatpush.xpose.msra.mxu0 0.0
  %187 = vmatpush.xpose.msra.mxu0 0.0
  %188 = vmatpush.xpose.msra.mxu0 0.0
  %189 = vmatpush.xpose.msra.mxu0 0.0
  %190 = vmatpush.xpose.msra.mxu0 0.0
  %191 = vmatpush.xpose.msra.mxu0 0.0
  %192 = vmatpush.xpose.msra.mxu0 0.0
  %193 = vmatpush.xpose.msra.mxu0 0.0
  %194 = vmatpush.xpose.msra.mxu0 0.0
  %195 = vmatpush.xpose.msra.mxu0 0.0
  %196 = vmatpush.xpose.msra.mxu0 0.0
  %197 = vmatpush.xpose.msra.mxu0 0.0
  %198 = vmatpush.xpose.msra.mxu0 0.0
  %199 = vmatpush.xpose.msra.mxu0 0.0
  %200 = vmatpush.xpose.msra.mxu0 0.0
  %v201 = vand.u32 %v184, 4294901760
  %202 = vmatpush.xpose.msra.mxu0 %v201
  %v203 = vand.u32 %v181, 4294901760
  %v204 = vsub.f32 %v181, %v203
  %v205 = vand.u32 %v204, 4294901760
  %v206 = vsub.f32 %v204, %v205
  %v207 = vand.u32 %v206, 4294901760
  %208 = vmatmul.f32.gmra.mxu0 %v207
  %v209 = vpop.f32.mrf.mxu0
  %v210 = vadd.f32 0.0, %v209
  %211 = vdwg.mxu0
  %212 = vmatpush.xpose.msra.mxu0 0.0
  %213 = vmatpush.xpose.msra.mxu0 0.0
  %214 = vmatpush.xpose.msra.mxu0 0.0
  %215 = vmatpush.xpose.msra.mxu0 0.0
  %216 = vmatpush.xpose.msra.mxu0 0.0
  %217 = vmatpush.xpose.msra.mxu0 0.0
  %218 = vmatpush.xpose.msra.mxu0 0.0
  %219 = vmatpush.xpose.msra.mxu0 0.0
  %220 = vmatpush.xpose.msra.mxu0 0.0
  %221 = vmatpush.xpose.msra.mxu0 0.0
  %222 = vmatpush.xpose.msra.mxu0 0.0
  %223 = vmatpush.xpose.msra.mxu0 0.0
  %224 = vmatpush.xpose.msra.mxu0 0.0
  %225 = vmatpush.xpose.msra.mxu0 0.0
  %226 = vmatpush.xpose.msra.mxu0 0.0
  %v227 = vand.u32 %v184, 4294901760
  %v228 = vsub.f32 %v184, %v227
  %v229 = vand.u32 %v228, 4294901760
  %v230 = vsub.f32 %v228, %v229
  %v231 = vand.u32 %v230, 4294901760
  %232 = vmatpush.xpose.msra.mxu0 %v231
  %v233 = vand.u32 %v181, 4294901760
  %234 = vmatmul.f32.gmra.mxu0 %v233
  %v235 = vpop.f32.mrf.mxu0
  %v236 = vadd.f32 %v210, %v235
  %237 = vdwg.mxu0
  %238 = vmatpush.xpose.msra.mxu0 0.0
  %239 = vmatpush.xpose.msra.mxu0 0.0
  %240 = vmatpush.xpose.msra.mxu0 0.0
  %241 = vmatpush.xpose.msra.mxu0 0.0
  %242 = vmatpush.xpose.msra.mxu0 0.0
  %243 = vmatpush.xpose.msra.mxu0 0.0
  %244 = vmatpush.xpose.msra.mxu0 0.0
  %245 = vmatpush.xpose.msra.mxu0 0.0
  %246 = vmatpush.xpose.msra.mxu0 0.0
  %247 = vmatpush.xpose.msra.mxu0 0.0
  %248 = vmatpush.xpose.msra.mxu0 0.0
  %249 = vmatpush.xpose.msra.mxu0 0.0
  %250 = vmatpush.xpose.msra.mxu0 0.0
  %251 = vmatpush.xpose.msra.mxu0 0.0
  %252 = vmatpush.xpose.msra.mxu0 0.0
  %v253 = vand.u32 %v184, 4294901760
  %v254 = vsub.f32 %v184, %v253
  %255 = vmatpush.xpose.msra.mxu0 %v254
  %v256 = vand.u32 %v181, 4294901760
  %v257 = vsub.f32 %v181, %v256
  %258 = vmatmul.f32.gmra.mxu0 %v257
  %v259 = vpop.f32.mrf.mxu0
  %v260 = vadd.f32 %v236, %v259
  %261 = vdwg.mxu0
  %262 = vmatpush.xpose.msra.mxu0 0.0
  %263 = vmatpush.xpose.msra.mxu0 0.0
  %264 = vmatpush.xpose.msra.mxu0 0.0
  %265 = vmatpush.xpose.msra.mxu0 0.0
  %266 = vmatpush.xpose.msra.mxu0 0.0
  %267 = vmatpush.xpose.msra.mxu0 0.0
  %268 = vmatpush.xpose.msra.mxu0 0.0
  %269 = vmatpush.xpose.msra.mxu0 0.0
  %270 = vmatpush.xpose.msra.mxu0 0.0
  %271 = vmatpush.xpose.msra.mxu0 0.0
  %272 = vmatpush.xpose.msra.mxu0 0.0
  %273 = vmatpush.xpose.msra.mxu0 0.0
  %274 = vmatpush.xpose.msra.mxu0 0.0
  %275 = vmatpush.xpose.msra.mxu0 0.0
  %276 = vmatpush.xpose.msra.mxu0 0.0
  %v277 = vand.u32 %v184, 4294901760
  %278 = vmatpush.xpose.msra.mxu0 %v277
  %v279 = vand.u32 %v181, 4294901760
  %v280 = vsub.f32 %v181, %v279
  %v281 = vand.u32 %v280, 4294901760
  %282 = vmatmul.f32.gmra.mxu0 %v281
  %v283 = vpop.f32.mrf.mxu0
  %v284 = vadd.f32 %v260, %v283
  %285 = vdwg.mxu0
  %286 = vmatpush.xpose.msra.mxu0 0.0
  %287 = vmatpush.xpose.msra.mxu0 0.0
  %288 = vmatpush.xpose.msra.mxu0 0.0
  %289 = vmatpush.xpose.msra.mxu0 0.0
  %290 = vmatpush.xpose.msra.mxu0 0.0
  %291 = vmatpush.xpose.msra.mxu0 0.0
  %292 = vmatpush.xpose.msra.mxu0 0.0
  %293 = vmatpush.xpose.msra.mxu0 0.0
  %294 = vmatpush.xpose.msra.mxu0 0.0
  %295 = vmatpush.xpose.msra.mxu0 0.0
  %296 = vmatpush.xpose.msra.mxu0 0.0
  %297 = vmatpush.xpose.msra.mxu0 0.0
  %298 = vmatpush.xpose.msra.mxu0 0.0
  %299 = vmatpush.xpose.msra.mxu0 0.0
  %300 = vmatpush.xpose.msra.mxu0 0.0
  %v301 = vand.u32 %v184, 4294901760
  %v302 = vsub.f32 %v184, %v301
  %v303 = vand.u32 %v302, 4294901760
  %304 = vmatpush.xpose.msra.mxu0 %v303
  %v305 = vand.u32 %v181, 4294901760
  %306 = vmatmul.f32.gmra.mxu0 %v305
  %v307 = vpop.f32.mrf.mxu0
  %v308 = vadd.f32 %v284, %v307
  %309 = vdwg.mxu0
  %310 = vmatpush.xpose.msra.mxu0 0.0
  %311 = vmatpush.xpose.msra.mxu0 0.0
  %312 = vmatpush.xpose.msra.mxu0 0.0
  %313 = vmatpush.xpose.msra.mxu0 0.0
  %314 = vmatpush.xpose.msra.mxu0 0.0
  %315 = vmatpush.xpose.msra.mxu0 0.0
  %316 = vmatpush.xpose.msra.mxu0 0.0
  %317 = vmatpush.xpose.msra.mxu0 0.0
  %318 = vmatpush.xpose.msra.mxu0 0.0
  %319 = vmatpush.xpose.msra.mxu0 0.0
  %320 = vmatpush.xpose.msra.mxu0 0.0
  %321 = vmatpush.xpose.msra.mxu0 0.0
  %322 = vmatpush.xpose.msra.mxu0 0.0
  %323 = vmatpush.xpose.msra.mxu0 0.0
  %324 = vmatpush.xpose.msra.mxu0 0.0
  %v325 = vand.u32 %v184, 4294901760
  %326 = vmatpush.xpose.msra.mxu0 %v325
  %v327 = vand.u32 %v181, 4294901760
  %328 = vmatmul.f32.gmra.mxu0 %v327
  %v329 = vpop.f32.mrf.mxu0
  %v330 = vadd.f32 %v308, %v329
  %331 = vdwg.mxu0
  %v333 = vsel %vm27, %v13, 0
  %v336 = vsel %vm27, %v21, 0
  %338 = vmatpush.xpose.msra.mxu0 0.0
  %339 = vmatpush.xpose.msra.mxu0 0.0
  %340 = vmatpush.xpose.msra.mxu0 0.0
  %341 = vmatpush.xpose.msra.mxu0 0.0
  %342 = vmatpush.xpose.msra.mxu0 0.0
  %343 = vmatpush.xpose.msra.mxu0 0.0
  %344 = vmatpush.xpose.msra.mxu0 0.0
  %345 = vmatpush.xpose.msra.mxu0 0.0
  %346 = vmatpush.xpose.msra.mxu0 0.0
  %347 = vmatpush.xpose.msra.mxu0 0.0
  %348 = vmatpush.xpose.msra.mxu0 0.0
  %349 = vmatpush.xpose.msra.mxu0 0.0
  %350 = vmatpush.xpose.msra.mxu0 0.0
  %351 = vmatpush.xpose.msra.mxu0 0.0
  %352 = vmatpush.xpose.msra.mxu0 0.0
  %v353 = vand.u32 %v336, 4294901760
  %354 = vmatpush.xpose.msra.mxu0 %v353
  %v355 = vand.u32 %v333, 4294901760
  %v356 = vsub.f32 %v333, %v355
  %v357 = vand.u32 %v356, 4294901760
  %v358 = vsub.f32 %v356, %v357
  %v359 = vand.u32 %v358, 4294901760
  %360 = vmatmul.f32.gmra.mxu0 %v359
  %v361 = vpop.f32.mrf.mxu0
  %v362 = vadd.f32 0.0, %v361
  %363 = vdwg.mxu0
  %364 = vmatpush.xpose.msra.mxu0 0.0
  %365 = vmatpush.xpose.msra.mxu0 0.0
  %366 = vmatpush.xpose.msra.mxu0 0.0
  %367 = vmatpush.xpose.msra.mxu0 0.0
  %368 = vmatpush.xpose.msra.mxu0 0.0
  %369 = vmatpush.xpose.msra.mxu0 0.0
  %370 = vmatpush.xpose.msra.mxu0 0.0
  %371 = vmatpush.xpose.msra.mxu0 0.0
  %372 = vmatpush.xpose.msra.mxu0 0.0
  %373 = vmatpush.xpose.msra.mxu0 0.0
  %374 = vmatpush.xpose.msra.mxu0 0.0
  %375 = vmatpush.xpose.msra.mxu0 0.0
  %376 = vmatpush.xpose.msra.mxu0 0.0
  %377 = vmatpush.xpose.msra.mxu0 0.0
  %378 = vmatpush.xpose.msra.mxu0 0.0
  %v379 = vand.u32 %v336, 4294901760
  %v380 = vsub.f32 %v336, %v379
  %v381 = vand.u32 %v380, 4294901760
  %v382 = vsub.f32 %v380, %v381
  %v383 = vand.u32 %v382, 4294901760
  %384 = vmatpush.xpose.msra.mxu0 %v383
  %v385 = vand.u32 %v333, 4294901760
  %386 = vmatmul.f32.gmra.mxu0 %v385
  %v387 = vpop.f32.mrf.mxu0
  %v388 = vadd.f32 %v362, %v387
  %389 = vdwg.mxu0
  %390 = vmatpush.xpose.msra.mxu0 0.0
  %391 = vmatpush.xpose.msra.mxu0 0.0
  %392 = vmatpush.xpose.msra.mxu0 0.0
  %393 = vmatpush.xpose.msra.mxu0 0.0
  %394 = vmatpush.xpose.msra.mxu0 0.0
  %395 = vmatpush.xpose.msra.mxu0 0.0
  %396 = vmatpush.xpose.msra.mxu0 0.0
  %397 = vmatpush.xpose.msra.mxu0 0.0
  %398 = vmatpush.xpose.msra.mxu0 0.0
  %399 = vmatpush.xpose.msra.mxu0 0.0
  %400 = vmatpush.xpose.msra.mxu0 0.0
  %401 = vmatpush.xpose.msra.mxu0 0.0
  %402 = vmatpush.xpose.msra.mxu0 0.0
  %403 = vmatpush.xpose.msra.mxu0 0.0
  %404 = vmatpush.xpose.msra.mxu0 0.0
  %v405 = vand.u32 %v336, 4294901760
  %v406 = vsub.f32 %v336, %v405
  %407 = vmatpush.xpose.msra.mxu0 %v406
  %v408 = vand.u32 %v333, 4294901760
  %v409 = vsub.f32 %v333, %v408
  %410 = vmatmul.f32.gmra.mxu0 %v409
  %v411 = vpop.f32.mrf.mxu0
  %v412 = vadd.f32 %v388, %v411
  %413 = vdwg.mxu0
  %414 = vmatpush.xpose.msra.mxu0 0.0
  %415 = vmatpush.xpose.msra.mxu0 0.0
  %416 = vmatpush.xpose.msra.mxu0 0.0
  %417 = vmatpush.xpose.msra.mxu0 0.0
  %418 = vmatpush.xpose.msra.mxu0 0.0
  %419 = vmatpush.xpose.msra.mxu0 0.0
  %420 = vmatpush.xpose.msra.mxu0 0.0
  %421 = vmatpush.xpose.msra.mxu0 0.0
  %422 = vmatpush.xpose.msra.mxu0 0.0
  %423 = vmatpush.xpose.msra.mxu0 0.0
  %424 = vmatpush.xpose.msra.mxu0 0.0
  %425 = vmatpush.xpose.msra.mxu0 0.0
  %426 = vmatpush.xpose.msra.mxu0 0.0
  %427 = vmatpush.xpose.msra.mxu0 0.0
  %428 = vmatpush.xpose.msra.mxu0 0.0
  %v429 = vand.u32 %v336, 4294901760
  %430 = vmatpush.xpose.msra.mxu0 %v429
  %v431 = vand.u32 %v333, 4294901760
  %v432 = vsub.f32 %v333, %v431
  %v433 = vand.u32 %v432, 4294901760
  %434 = vmatmul.f32.gmra.mxu0 %v433
  %v435 = vpop.f32.mrf.mxu0
  %v436 = vadd.f32 %v412, %v435
  %437 = vdwg.mxu0
  %438 = vmatpush.xpose.msra.mxu0 0.0
  %439 = vmatpush.xpose.msra.mxu0 0.0
  %440 = vmatpush.xpose.msra.mxu0 0.0
  %441 = vmatpush.xpose.msra.mxu0 0.0
  %442 = vmatpush.xpose.msra.mxu0 0.0
  %443 = vmatpush.xpose.msra.mxu0 0.0
  %444 = vmatpush.xpose.msra.mxu0 0.0
  %445 = vmatpush.xpose.msra.mxu0 0.0
  %446 = vmatpush.xpose.msra.mxu0 0.0
  %447 = vmatpush.xpose.msra.mxu0 0.0
  %448 = vmatpush.xpose.msra.mxu0 0.0
  %449 = vmatpush.xpose.msra.mxu0 0.0
  %450 = vmatpush.xpose.msra.mxu0 0.0
  %451 = vmatpush.xpose.msra.mxu0 0.0
  %452 = vmatpush.xpose.msra.mxu0 0.0
  %v453 = vand.u32 %v336, 4294901760
  %v454 = vsub.f32 %v336, %v453
  %v455 = vand.u32 %v454, 4294901760
  %456 = vmatpush.xpose.msra.mxu0 %v455
  %v457 = vand.u32 %v333, 4294901760
  %458 = vmatmul.f32.gmra.mxu0 %v457
  %v459 = vpop.f32.mrf.mxu0
  %v460 = vadd.f32 %v436, %v459
  %461 = vdwg.mxu0
  %462 = vmatpush.xpose.msra.mxu0 0.0
  %463 = vmatpush.xpose.msra.mxu0 0.0
  %464 = vmatpush.xpose.msra.mxu0 0.0
  %465 = vmatpush.xpose.msra.mxu0 0.0
  %466 = vmatpush.xpose.msra.mxu0 0.0
  %467 = vmatpush.xpose.msra.mxu0 0.0
  %468 = vmatpush.xpose.msra.mxu0 0.0
  %469 = vmatpush.xpose.msra.mxu0 0.0
  %470 = vmatpush.xpose.msra.mxu0 0.0
  %471 = vmatpush.xpose.msra.mxu0 0.0
  %472 = vmatpush.xpose.msra.mxu0 0.0
  %473 = vmatpush.xpose.msra.mxu0 0.0
  %474 = vmatpush.xpose.msra.mxu0 0.0
  %475 = vmatpush.xpose.msra.mxu0 0.0
  %476 = vmatpush.xpose.msra.mxu0 0.0
  %v477 = vand.u32 %v336, 4294901760
  %478 = vmatpush.xpose.msra.mxu0 %v477
  %v479 = vand.u32 %v333, 4294901760
  %480 = vmatmul.f32.gmra.mxu0 %v479
  %v481 = vpop.f32.mrf.mxu0
  %v482 = vadd.f32 %v460, %v481
  %483 = vdwg.mxu0
  %v485 = vsel %vm27, %v14, 0
  %v488 = vsel %vm27, %v22, 0
  %490 = vmatpush.xpose.msra.mxu0 0.0
  %491 = vmatpush.xpose.msra.mxu0 0.0
  %492 = vmatpush.xpose.msra.mxu0 0.0
  %493 = vmatpush.xpose.msra.mxu0 0.0
  %494 = vmatpush.xpose.msra.mxu0 0.0
  %495 = vmatpush.xpose.msra.mxu0 0.0
  %496 = vmatpush.xpose.msra.mxu0 0.0
  %497 = vmatpush.xpose.msra.mxu0 0.0
  %498 = vmatpush.xpose.msra.mxu0 0.0
  %499 = vmatpush.xpose.msra.mxu0 0.0
  %500 = vmatpush.xpose.msra.mxu0 0.0
  %501 = vmatpush.xpose.msra.mxu0 0.0
  %502 = vmatpush.xpose.msra.mxu0 0.0
  %503 = vmatpush.xpose.msra.mxu0 0.0
  %504 = vmatpush.xpose.msra.mxu0 0.0
  %v505 = vand.u32 %v488, 4294901760
  %506 = vmatpush.xpose.msra.mxu0 %v505
  %v507 = vand.u32 %v485, 4294901760
  %v508 = vsub.f32 %v485, %v507
  %v509 = vand.u32 %v508, 4294901760
  %v510 = vsub.f32 %v508, %v509
  %v511 = vand.u32 %v510, 4294901760
  %512 = vmatmul.f32.gmra.mxu0 %v511
  %v513 = vpop.f32.mrf.mxu0
  %v514 = vadd.f32 0.0, %v513
  %515 = vdwg.mxu0
  %516 = vmatpush.xpose.msra.mxu0 0.0
  %517 = vmatpush.xpose.msra.mxu0 0.0
  %518 = vmatpush.xpose.msra.mxu0 0.0
  %519 = vmatpush.xpose.msra.mxu0 0.0
  %520 = vmatpush.xpose.msra.mxu0 0.0
  %521 = vmatpush.xpose.msra.mxu0 0.0
  %522 = vmatpush.xpose.msra.mxu0 0.0
  %523 = vmatpush.xpose.msra.mxu0 0.0
  %524 = vmatpush.xpose.msra.mxu0 0.0
  %525 = vmatpush.xpose.msra.mxu0 0.0
  %526 = vmatpush.xpose.msra.mxu0 0.0
  %527 = vmatpush.xpose.msra.mxu0 0.0
  %528 = vmatpush.xpose.msra.mxu0 0.0
  %529 = vmatpush.xpose.msra.mxu0 0.0
  %530 = vmatpush.xpose.msra.mxu0 0.0
  %v531 = vand.u32 %v488, 4294901760
  %v532 = vsub.f32 %v488, %v531
  %v533 = vand.u32 %v532, 4294901760
  %v534 = vsub.f32 %v532, %v533
  %v535 = vand.u32 %v534, 4294901760
  %536 = vmatpush.xpose.msra.mxu0 %v535
  %v537 = vand.u32 %v485, 4294901760
  %538 = vmatmul.f32.gmra.mxu0 %v537
  %v539 = vpop.f32.mrf.mxu0
  %v540 = vadd.f32 %v514, %v539
  %541 = vdwg.mxu0
  %542 = vmatpush.xpose.msra.mxu0 0.0
  %543 = vmatpush.xpose.msra.mxu0 0.0
  %544 = vmatpush.xpose.msra.mxu0 0.0
  %545 = vmatpush.xpose.msra.mxu0 0.0
  %546 = vmatpush.xpose.msra.mxu0 0.0
  %547 = vmatpush.xpose.msra.mxu0 0.0
  %548 = vmatpush.xpose.msra.mxu0 0.0
  %549 = vmatpush.xpose.msra.mxu0 0.0
  %550 = vmatpush.xpose.msra.mxu0 0.0
  %551 = vmatpush.xpose.msra.mxu0 0.0
  %552 = vmatpush.xpose.msra.mxu0 0.0
  %553 = vmatpush.xpose.msra.mxu0 0.0
  %554 = vmatpush.xpose.msra.mxu0 0.0
  %555 = vmatpush.xpose.msra.mxu0 0.0
  %556 = vmatpush.xpose.msra.mxu0 0.0
  %v557 = vand.u32 %v488, 4294901760
  %v558 = vsub.f32 %v488, %v557
  %559 = vmatpush.xpose.msra.mxu0 %v558
  %v560 = vand.u32 %v485, 4294901760
  %v561 = vsub.f32 %v485, %v560
  %562 = vmatmul.f32.gmra.mxu0 %v561
  %v563 = vpop.f32.mrf.mxu0
  %v564 = vadd.f32 %v540, %v563
  %565 = vdwg.mxu0
  %566 = vmatpush.xpose.msra.mxu0 0.0
  %567 = vmatpush.xpose.msra.mxu0 0.0
  %568 = vmatpush.xpose.msra.mxu0 0.0
  %569 = vmatpush.xpose.msra.mxu0 0.0
  %570 = vmatpush.xpose.msra.mxu0 0.0
  %571 = vmatpush.xpose.msra.mxu0 0.0
  %572 = vmatpush.xpose.msra.mxu0 0.0
  %573 = vmatpush.xpose.msra.mxu0 0.0
  %574 = vmatpush.xpose.msra.mxu0 0.0
  %575 = vmatpush.xpose.msra.mxu0 0.0
  %576 = vmatpush.xpose.msra.mxu0 0.0
  %577 = vmatpush.xpose.msra.mxu0 0.0
  %578 = vmatpush.xpose.msra.mxu0 0.0
  %579 = vmatpush.xpose.msra.mxu0 0.0
  %580 = vmatpush.xpose.msra.mxu0 0.0
  %v581 = vand.u32 %v488, 4294901760
  %582 = vmatpush.xpose.msra.mxu0 %v581
  %v583 = vand.u32 %v485, 4294901760
  %v584 = vsub.f32 %v485, %v583
  %v585 = vand.u32 %v584, 4294901760
  %586 = vmatmul.f32.gmra.mxu0 %v585
  %v587 = vpop.f32.mrf.mxu0
  %v588 = vadd.f32 %v564, %v587
  %589 = vdwg.mxu0
  %590 = vmatpush.xpose.msra.mxu0 0.0
  %591 = vmatpush.xpose.msra.mxu0 0.0
  %592 = vmatpush.xpose.msra.mxu0 0.0
  %593 = vmatpush.xpose.msra.mxu0 0.0
  %594 = vmatpush.xpose.msra.mxu0 0.0
  %595 = vmatpush.xpose.msra.mxu0 0.0
  %596 = vmatpush.xpose.msra.mxu0 0.0
  %597 = vmatpush.xpose.msra.mxu0 0.0
  %598 = vmatpush.xpose.msra.mxu0 0.0
  %599 = vmatpush.xpose.msra.mxu0 0.0
  %600 = vmatpush.xpose.msra.mxu0 0.0
  %601 = vmatpush.xpose.msra.mxu0 0.0
  %602 = vmatpush.xpose.msra.mxu0 0.0
  %603 = vmatpush.xpose.msra.mxu0 0.0
  %604 = vmatpush.xpose.msra.mxu0 0.0
  %v605 = vand.u32 %v488, 4294901760
  %v606 = vsub.f32 %v488, %v605
  %v607 = vand.u32 %v606, 4294901760
  %608 = vmatpush.xpose.msra.mxu0 %v607
  %v609 = vand.u32 %v485, 4294901760
  %610 = vmatmul.f32.gmra.mxu0 %v609
  %v611 = vpop.f32.mrf.mxu0
  %v612 = vadd.f32 %v588, %v611
  %613 = vdwg.mxu0
  %614 = vmatpush.xpose.msra.mxu0 0.0
  %615 = vmatpush.xpose.msra.mxu0 0.0
  %616 = vmatpush.xpose.msra.mxu0 0.0
  %617 = vmatpush.xpose.msra.mxu0 0.0
  %618 = vmatpush.xpose.msra.mxu0 0.0
  %619 = vmatpush.xpose.msra.mxu0 0.0
  %620 = vmatpush.xpose.msra.mxu0 0.0
  %621 = vmatpush.xpose.msra.mxu0 0.0
  %622 = vmatpush.xpose.msra.mxu0 0.0
  %623 = vmatpush.xpose.msra.mxu0 0.0
  %624 = vmatpush.xpose.msra.mxu0 0.0
  %625 = vmatpush.xpose.msra.mxu0 0.0
  %626 = vmatpush.xpose.msra.mxu0 0.0
  %627 = vmatpush.xpose.msra.mxu0 0.0
  %628 = vmatpush.xpose.msra.mxu0 0.0
  %v629 = vand.u32 %v488, 4294901760
  %630 = vmatpush.xpose.msra.mxu0 %v629
  %v631 = vand.u32 %v485, 4294901760
  %632 = vmatmul.f32.gmra.mxu0 %v631
  %v633 = vpop.f32.mrf.mxu0
  %v634 = vadd.f32 %v612, %v633
  %635 = vdwg.mxu0
  %v637 = vsel %vm27, %v15, 0
  %v640 = vsel %vm27, %v23, 0
  %642 = vmatpush.xpose.msra.mxu0 0.0
  %643 = vmatpush.xpose.msra.mxu0 0.0
  %644 = vmatpush.xpose.msra.mxu0 0.0
  %645 = vmatpush.xpose.msra.mxu0 0.0
  %646 = vmatpush.xpose.msra.mxu0 0.0
  %647 = vmatpush.xpose.msra.mxu0 0.0
  %648 = vmatpush.xpose.msra.mxu0 0.0
  %649 = vmatpush.xpose.msra.mxu0 0.0
  %650 = vmatpush.xpose.msra.mxu0 0.0
  %651 = vmatpush.xpose.msra.mxu0 0.0
  %652 = vmatpush.xpose.msra.mxu0 0.0
  %653 = vmatpush.xpose.msra.mxu0 0.0
  %654 = vmatpush.xpose.msra.mxu0 0.0
  %655 = vmatpush.xpose.msra.mxu0 0.0
  %656 = vmatpush.xpose.msra.mxu0 0.0
  %v657 = vand.u32 %v640, 4294901760
  %658 = vmatpush.xpose.msra.mxu0 %v657
  %v659 = vand.u32 %v637, 4294901760
  %v660 = vsub.f32 %v637, %v659
  %v661 = vand.u32 %v660, 4294901760
  %v662 = vsub.f32 %v660, %v661
  %v663 = vand.u32 %v662, 4294901760
  %664 = vmatmul.f32.gmra.mxu0 %v663
  %v665 = vpop.f32.mrf.mxu0
  %v666 = vadd.f32 0.0, %v665
  %667 = vdwg.mxu0
  %668 = vmatpush.xpose.msra.mxu0 0.0
  %669 = vmatpush.xpose.msra.mxu0 0.0
  %670 = vmatpush.xpose.msra.mxu0 0.0
  %671 = vmatpush.xpose.msra.mxu0 0.0
  %672 = vmatpush.xpose.msra.mxu0 0.0
  %673 = vmatpush.xpose.msra.mxu0 0.0
  %674 = vmatpush.xpose.msra.mxu0 0.0
  %675 = vmatpush.xpose.msra.mxu0 0.0
  %676 = vmatpush.xpose.msra.mxu0 0.0
  %677 = vmatpush.xpose.msra.mxu0 0.0
  %678 = vmatpush.xpose.msra.mxu0 0.0
  %679 = vmatpush.xpose.msra.mxu0 0.0
  %680 = vmatpush.xpose.msra.mxu0 0.0
  %681 = vmatpush.xpose.msra.mxu0 0.0
  %682 = vmatpush.xpose.msra.mxu0 0.0
  %v683 = vand.u32 %v640, 4294901760
  %v684 = vsub.f32 %v640, %v683
  %v685 = vand.u32 %v684, 4294901760
  %v686 = vsub.f32 %v684, %v685
  %v687 = vand.u32 %v686, 4294901760
  %688 = vmatpush.xpose.msra.mxu0 %v687
  %v689 = vand.u32 %v637, 4294901760
  %690 = vmatmul.f32.gmra.mxu0 %v689
  %v691 = vpop.f32.mrf.mxu0
  %v692 = vadd.f32 %v666, %v691
  %693 = vdwg.mxu0
  %694 = vmatpush.xpose.msra.mxu0 0.0
  %695 = vmatpush.xpose.msra.mxu0 0.0
  %696 = vmatpush.xpose.msra.mxu0 0.0
  %697 = vmatpush.xpose.msra.mxu0 0.0
  %698 = vmatpush.xpose.msra.mxu0 0.0
  %699 = vmatpush.xpose.msra.mxu0 0.0
  %700 = vmatpush.xpose.msra.mxu0 0.0
  %701 = vmatpush.xpose.msra.mxu0 0.0
  %702 = vmatpush.xpose.msra.mxu0 0.0
  %703 = vmatpush.xpose.msra.mxu0 0.0
  %704 = vmatpush.xpose.msra.mxu0 0.0
  %705 = vmatpush.xpose.msra.mxu0 0.0
  %706 = vmatpush.xpose.msra.mxu0 0.0
  %707 = vmatpush.xpose.msra.mxu0 0.0
  %708 = vmatpush.xpose.msra.mxu0 0.0
  %v709 = vand.u32 %v640, 4294901760
  %v710 = vsub.f32 %v640, %v709
  %711 = vmatpush.xpose.msra.mxu0 %v710
  %v712 = vand.u32 %v637, 4294901760
  %v713 = vsub.f32 %v637, %v712
  %714 = vmatmul.f32.gmra.mxu0 %v713
  %v715 = vpop.f32.mrf.mxu0
  %v716 = vadd.f32 %v692, %v715
  %717 = vdwg.mxu0
  %718 = vmatpush.xpose.msra.mxu0 0.0
  %719 = vmatpush.xpose.msra.mxu0 0.0
  %720 = vmatpush.xpose.msra.mxu0 0.0
  %721 = vmatpush.xpose.msra.mxu0 0.0
  %722 = vmatpush.xpose.msra.mxu0 0.0
  %723 = vmatpush.xpose.msra.mxu0 0.0
  %724 = vmatpush.xpose.msra.mxu0 0.0
  %725 = vmatpush.xpose.msra.mxu0 0.0
  %726 = vmatpush.xpose.msra.mxu0 0.0
  %727 = vmatpush.xpose.msra.mxu0 0.0
  %728 = vmatpush.xpose.msra.mxu0 0.0
  %729 = vmatpush.xpose.msra.mxu0 0.0
  %730 = vmatpush.xpose.msra.mxu0 0.0
  %731 = vmatpush.xpose.msra.mxu0 0.0
  %732 = vmatpush.xpose.msra.mxu0 0.0
  %v733 = vand.u32 %v640, 4294901760
  %734 = vmatpush.xpose.msra.mxu0 %v733
  %v735 = vand.u32 %v637, 4294901760
  %v736 = vsub.f32 %v637, %v735
  %v737 = vand.u32 %v736, 4294901760
  %738 = vmatmul.f32.gmra.mxu0 %v737
  %v739 = vpop.f32.mrf.mxu0
  %v740 = vadd.f32 %v716, %v739
  %741 = vdwg.mxu0
  %742 = vmatpush.xpose.msra.mxu0 0.0
  %743 = vmatpush.xpose.msra.mxu0 0.0
  %744 = vmatpush.xpose.msra.mxu0 0.0
  %745 = vmatpush.xpose.msra.mxu0 0.0
  %746 = vmatpush.xpose.msra.mxu0 0.0
  %747 = vmatpush.xpose.msra.mxu0 0.0
  %748 = vmatpush.xpose.msra.mxu0 0.0
  %749 = vmatpush.xpose.msra.mxu0 0.0
  %750 = vmatpush.xpose.msra.mxu0 0.0
  %751 = vmatpush.xpose.msra.mxu0 0.0
  %752 = vmatpush.xpose.msra.mxu0 0.0
  %753 = vmatpush.xpose.msra.mxu0 0.0
  %754 = vmatpush.xpose.msra.mxu0 0.0
  %755 = vmatpush.xpose.msra.mxu0 0.0
  %756 = vmatpush.xpose.msra.mxu0 0.0
  %v757 = vand.u32 %v640, 4294901760
  %v758 = vsub.f32 %v640, %v757
  %v759 = vand.u32 %v758, 4294901760
  %760 = vmatpush.xpose.msra.mxu0 %v759
  %v761 = vand.u32 %v637, 4294901760
  %762 = vmatmul.f32.gmra.mxu0 %v761
  %v763 = vpop.f32.mrf.mxu0
  %v764 = vadd.f32 %v740, %v763
  %765 = vdwg.mxu0
  %766 = vmatpush.xpose.msra.mxu0 0.0
  %767 = vmatpush.xpose.msra.mxu0 0.0
  %768 = vmatpush.xpose.msra.mxu0 0.0
  %769 = vmatpush.xpose.msra.mxu0 0.0
  %770 = vmatpush.xpose.msra.mxu0 0.0
  %771 = vmatpush.xpose.msra.mxu0 0.0
  %772 = vmatpush.xpose.msra.mxu0 0.0
  %773 = vmatpush.xpose.msra.mxu0 0.0
  %774 = vmatpush.xpose.msra.mxu0 0.0
  %775 = vmatpush.xpose.msra.mxu0 0.0
  %776 = vmatpush.xpose.msra.mxu0 0.0
  %777 = vmatpush.xpose.msra.mxu0 0.0
  %778 = vmatpush.xpose.msra.mxu0 0.0
  %779 = vmatpush.xpose.msra.mxu0 0.0
  %780 = vmatpush.xpose.msra.mxu0 0.0
  %v781 = vand.u32 %v640, 4294901760
  %782 = vmatpush.xpose.msra.mxu0 %v781
  %v783 = vand.u32 %v637, 4294901760
  %784 = vmatmul.f32.gmra.mxu0 %v783
  %v785 = vpop.f32.mrf.mxu0
  %v786 = vadd.f32 %v764, %v785
  %787 = vdwg.mxu0
  %v789 = vsel %vm27, %v16, 0
  %v792 = vsel %vm27, %v24, 0
  %794 = vmatpush.xpose.msra.mxu0 0.0
  %795 = vmatpush.xpose.msra.mxu0 0.0
  %796 = vmatpush.xpose.msra.mxu0 0.0
  %797 = vmatpush.xpose.msra.mxu0 0.0
  %798 = vmatpush.xpose.msra.mxu0 0.0
  %799 = vmatpush.xpose.msra.mxu0 0.0
  %800 = vmatpush.xpose.msra.mxu0 0.0
  %801 = vmatpush.xpose.msra.mxu0 0.0
  %802 = vmatpush.xpose.msra.mxu0 0.0
  %803 = vmatpush.xpose.msra.mxu0 0.0
  %804 = vmatpush.xpose.msra.mxu0 0.0
  %805 = vmatpush.xpose.msra.mxu0 0.0
  %806 = vmatpush.xpose.msra.mxu0 0.0
  %807 = vmatpush.xpose.msra.mxu0 0.0
  %808 = vmatpush.xpose.msra.mxu0 0.0
  %v809 = vand.u32 %v792, 4294901760
  %810 = vmatpush.xpose.msra.mxu0 %v809
  %v811 = vand.u32 %v789, 4294901760
  %v812 = vsub.f32 %v789, %v811
  %v813 = vand.u32 %v812, 4294901760
  %v814 = vsub.f32 %v812, %v813
  %v815 = vand.u32 %v814, 4294901760
  %816 = vmatmul.f32.gmra.mxu0 %v815
  %v817 = vpop.f32.mrf.mxu0
  %v818 = vadd.f32 0.0, %v817
  %819 = vdwg.mxu0
  %820 = vmatpush.xpose.msra.mxu0 0.0
  %821 = vmatpush.xpose.msra.mxu0 0.0
  %822 = vmatpush.xpose.msra.mxu0 0.0
  %823 = vmatpush.xpose.msra.mxu0 0.0
  %824 = vmatpush.xpose.msra.mxu0 0.0
  %825 = vmatpush.xpose.msra.mxu0 0.0
  %826 = vmatpush.xpose.msra.mxu0 0.0
  %827 = vmatpush.xpose.msra.mxu0 0.0
  %828 = vmatpush.xpose.msra.mxu0 0.0
  %829 = vmatpush.xpose.msra.mxu0 0.0
  %830 = vmatpush.xpose.msra.mxu0 0.0
  %831 = vmatpush.xpose.msra.mxu0 0.0
  %832 = vmatpush.xpose.msra.mxu0 0.0
  %833 = vmatpush.xpose.msra.mxu0 0.0
  %834 = vmatpush.xpose.msra.mxu0 0.0
  %v835 = vand.u32 %v792, 4294901760
  %v836 = vsub.f32 %v792, %v835
  %v837 = vand.u32 %v836, 4294901760
  %v838 = vsub.f32 %v836, %v837
  %v839 = vand.u32 %v838, 4294901760
  %840 = vmatpush.xpose.msra.mxu0 %v839
  %v841 = vand.u32 %v789, 4294901760
  %842 = vmatmul.f32.gmra.mxu0 %v841
  %v843 = vpop.f32.mrf.mxu0
  %v844 = vadd.f32 %v818, %v843
  %845 = vdwg.mxu0
  %846 = vmatpush.xpose.msra.mxu0 0.0
  %847 = vmatpush.xpose.msra.mxu0 0.0
  %848 = vmatpush.xpose.msra.mxu0 0.0
  %849 = vmatpush.xpose.msra.mxu0 0.0
  %850 = vmatpush.xpose.msra.mxu0 0.0
  %851 = vmatpush.xpose.msra.mxu0 0.0
  %852 = vmatpush.xpose.msra.mxu0 0.0
  %853 = vmatpush.xpose.msra.mxu0 0.0
  %854 = vmatpush.xpose.msra.mxu0 0.0
  %855 = vmatpush.xpose.msra.mxu0 0.0
  %856 = vmatpush.xpose.msra.mxu0 0.0
  %857 = vmatpush.xpose.msra.mxu0 0.0
  %858 = vmatpush.xpose.msra.mxu0 0.0
  %859 = vmatpush.xpose.msra.mxu0 0.0
  %860 = vmatpush.xpose.msra.mxu0 0.0
  %v861 = vand.u32 %v792, 4294901760
  %v862 = vsub.f32 %v792, %v861
  %863 = vmatpush.xpose.msra.mxu0 %v862
  %v864 = vand.u32 %v789, 4294901760
  %v865 = vsub.f32 %v789, %v864
  %866 = vmatmul.f32.gmra.mxu0 %v865
  %v867 = vpop.f32.mrf.mxu0
  %v868 = vadd.f32 %v844, %v867
  %869 = vdwg.mxu0
  %870 = vmatpush.xpose.msra.mxu0 0.0
  %871 = vmatpush.xpose.msra.mxu0 0.0
  %872 = vmatpush.xpose.msra.mxu0 0.0
  %873 = vmatpush.xpose.msra.mxu0 0.0
  %874 = vmatpush.xpose.msra.mxu0 0.0
  %875 = vmatpush.xpose.msra.mxu0 0.0
  %876 = vmatpush.xpose.msra.mxu0 0.0
  %877 = vmatpush.xpose.msra.mxu0 0.0
  %878 = vmatpush.xpose.msra.mxu0 0.0
  %879 = vmatpush.xpose.msra.mxu0 0.0
  %880 = vmatpush.xpose.msra.mxu0 0.0
  %881 = vmatpush.xpose.msra.mxu0 0.0
  %882 = vmatpush.xpose.msra.mxu0 0.0
  %883 = vmatpush.xpose.msra.mxu0 0.0
  %884 = vmatpush.xpose.msra.mxu0 0.0
  %v885 = vand.u32 %v792, 4294901760
  %886 = vmatpush.xpose.msra.mxu0 %v885
  %v887 = vand.u32 %v789, 4294901760
  %v888 = vsub.f32 %v789, %v887
  %v889 = vand.u32 %v888, 4294901760
  %890 = vmatmul.f32.gmra.mxu0 %v889
  %v891 = vpop.f32.mrf.mxu0
  %v892 = vadd.f32 %v868, %v891
  %893 = vdwg.mxu0
  %894 = vmatpush.xpose.msra.mxu0 0.0
  %895 = vmatpush.xpose.msra.mxu0 0.0
  %896 = vmatpush.xpose.msra.mxu0 0.0
  %897 = vmatpush.xpose.msra.mxu0 0.0
  %898 = vmatpush.xpose.msra.mxu0 0.0
  %899 = vmatpush.xpose.msra.mxu0 0.0
  %900 = vmatpush.xpose.msra.mxu0 0.0
  %901 = vmatpush.xpose.msra.mxu0 0.0
  %902 = vmatpush.xpose.msra.mxu0 0.0
  %903 = vmatpush.xpose.msra.mxu0 0.0
  %904 = vmatpush.xpose.msra.mxu0 0.0
  %905 = vmatpush.xpose.msra.mxu0 0.0
  %906 = vmatpush.xpose.msra.mxu0 0.0
  %907 = vmatpush.xpose.msra.mxu0 0.0
  %908 = vmatpush.xpose.msra.mxu0 0.0
  %v909 = vand.u32 %v792, 4294901760
  %v910 = vsub.f32 %v792, %v909
  %v911 = vand.u32 %v910, 4294901760
  %912 = vmatpush.xpose.msra.mxu0 %v911
  %v913 = vand.u32 %v789, 4294901760
  %914 = vmatmul.f32.gmra.mxu0 %v913
  %v915 = vpop.f32.mrf.mxu0
  %v916 = vadd.f32 %v892, %v915
  %917 = vdwg.mxu0
  %918 = vmatpush.xpose.msra.mxu0 0.0
  %919 = vmatpush.xpose.msra.mxu0 0.0
  %920 = vmatpush.xpose.msra.mxu0 0.0
  %921 = vmatpush.xpose.msra.mxu0 0.0
  %922 = vmatpush.xpose.msra.mxu0 0.0
  %923 = vmatpush.xpose.msra.mxu0 0.0
  %924 = vmatpush.xpose.msra.mxu0 0.0
  %925 = vmatpush.xpose.msra.mxu0 0.0
  %926 = vmatpush.xpose.msra.mxu0 0.0
  %927 = vmatpush.xpose.msra.mxu0 0.0
  %928 = vmatpush.xpose.msra.mxu0 0.0
  %929 = vmatpush.xpose.msra.mxu0 0.0
  %930 = vmatpush.xpose.msra.mxu0 0.0
  %931 = vmatpush.xpose.msra.mxu0 0.0
  %932 = vmatpush.xpose.msra.mxu0 0.0
  %v933 = vand.u32 %v792, 4294901760
  %934 = vmatpush.xpose.msra.mxu0 %v933
  %v935 = vand.u32 %v789, 4294901760
  %936 = vmatmul.f32.gmra.mxu0 %v935
  %v937 = vpop.f32.mrf.mxu0
  %v938 = vadd.f32 %v916, %v937
  %939 = vdwg.mxu0
  %v941 = vsel %vm27, %v17, 0
  %v944 = vsel %vm27, %v25, 0
  %946 = vmatpush.xpose.msra.mxu0 0.0
  %947 = vmatpush.xpose.msra.mxu0 0.0
  %948 = vmatpush.xpose.msra.mxu0 0.0
  %949 = vmatpush.xpose.msra.mxu0 0.0
  %950 = vmatpush.xpose.msra.mxu0 0.0
  %951 = vmatpush.xpose.msra.mxu0 0.0
  %952 = vmatpush.xpose.msra.mxu0 0.0
  %953 = vmatpush.xpose.msra.mxu0 0.0
  %954 = vmatpush.xpose.msra.mxu0 0.0
  %955 = vmatpush.xpose.msra.mxu0 0.0
  %956 = vmatpush.xpose.msra.mxu0 0.0
  %957 = vmatpush.xpose.msra.mxu0 0.0
  %958 = vmatpush.xpose.msra.mxu0 0.0
  %959 = vmatpush.xpose.msra.mxu0 0.0
  %960 = vmatpush.xpose.msra.mxu0 0.0
  %v961 = vand.u32 %v944, 4294901760
  %962 = vmatpush.xpose.msra.mxu0 %v961
  %v963 = vand.u32 %v941, 4294901760
  %v964 = vsub.f32 %v941, %v963
  %v965 = vand.u32 %v964, 4294901760
  %v966 = vsub.f32 %v964, %v965
  %v967 = vand.u32 %v966, 4294901760
  %968 = vmatmul.f32.gmra.mxu0 %v967
  %v969 = vpop.f32.mrf.mxu0
  %v970 = vadd.f32 0.0, %v969
  %971 = vdwg.mxu0
  %972 = vmatpush.xpose.msra.mxu0 0.0
  %973 = vmatpush.xpose.msra.mxu0 0.0
  %974 = vmatpush.xpose.msra.mxu0 0.0
  %975 = vmatpush.xpose.msra.mxu0 0.0
  %976 = vmatpush.xpose.msra.mxu0 0.0
  %977 = vmatpush.xpose.msra.mxu0 0.0
  %978 = vmatpush.xpose.msra.mxu0 0.0
  %979 = vmatpush.xpose.msra.mxu0 0.0
  %980 = vmatpush.xpose.msra.mxu0 0.0
  %981 = vmatpush.xpose.msra.mxu0 0.0
  %982 = vmatpush.xpose.msra.mxu0 0.0
  %983 = vmatpush.xpose.msra.mxu0 0.0
  %984 = vmatpush.xpose.msra.mxu0 0.0
  %985 = vmatpush.xpose.msra.mxu0 0.0
  %986 = vmatpush.xpose.msra.mxu0 0.0
  %v987 = vand.u32 %v944, 4294901760
  %v988 = vsub.f32 %v944, %v987
  %v989 = vand.u32 %v988, 4294901760
  %v990 = vsub.f32 %v988, %v989
  %v991 = vand.u32 %v990, 4294901760
  %992 = vmatpush.xpose.msra.mxu0 %v991
  %v993 = vand.u32 %v941, 4294901760
  %994 = vmatmul.f32.gmra.mxu0 %v993
  %v995 = vpop.f32.mrf.mxu0
  %v996 = vadd.f32 %v970, %v995
  %997 = vdwg.mxu0
  %998 = vmatpush.xpose.msra.mxu0 0.0
  %999 = vmatpush.xpose.msra.mxu0 0.0
  %1000 = vmatpush.xpose.msra.mxu0 0.0
  %1001 = vmatpush.xpose.msra.mxu0 0.0
  %1002 = vmatpush.xpose.msra.mxu0 0.0
  %1003 = vmatpush.xpose.msra.mxu0 0.0
  %1004 = vmatpush.xpose.msra.mxu0 0.0
  %1005 = vmatpush.xpose.msra.mxu0 0.0
  %1006 = vmatpush.xpose.msra.mxu0 0.0
  %1007 = vmatpush.xpose.msra.mxu0 0.0
  %1008 = vmatpush.xpose.msra.mxu0 0.0
  %1009 = vmatpush.xpose.msra.mxu0 0.0
  %1010 = vmatpush.xpose.msra.mxu0 0.0
  %1011 = vmatpush.xpose.msra.mxu0 0.0
  %1012 = vmatpush.xpose.msra.mxu0 0.0
  %v1013 = vand.u32 %v944, 4294901760
  %v1014 = vsub.f32 %v944, %v1013
  %1015 = vmatpush.xpose.msra.mxu0 %v1014
  %v1016 = vand.u32 %v941, 4294901760
  %v1017 = vsub.f32 %v941, %v1016
  %1018 = vmatmul.f32.gmra.mxu0 %v1017
  %v1019 = vpop.f32.mrf.mxu0
  %v1020 = vadd.f32 %v996, %v1019
  %1021 = vdwg.mxu0
  %1022 = vmatpush.xpose.msra.mxu0 0.0
  %1023 = vmatpush.xpose.msra.mxu0 0.0
  %1024 = vmatpush.xpose.msra.mxu0 0.0
  %1025 = vmatpush.xpose.msra.mxu0 0.0
  %1026 = vmatpush.xpose.msra.mxu0 0.0
  %1027 = vmatpush.xpose.msra.mxu0 0.0
  %1028 = vmatpush.xpose.msra.mxu0 0.0
  %1029 = vmatpush.xpose.msra.mxu0 0.0
  %1030 = vmatpush.xpose.msra.mxu0 0.0
  %1031 = vmatpush.xpose.msra.mxu0 0.0
  %1032 = vmatpush.xpose.msra.mxu0 0.0
  %1033 = vmatpush.xpose.msra.mxu0 0.0
  %1034 = vmatpush.xpose.msra.mxu0 0.0
  %1035 = vmatpush.xpose.msra.mxu0 0.0
  %1036 = vmatpush.xpose.msra.mxu0 0.0
  %v1037 = vand.u32 %v944, 4294901760
  %1038 = vmatpush.xpose.msra.mxu0 %v1037
  %v1039 = vand.u32 %v941, 4294901760
  %v1040 = vsub.f32 %v941, %v1039
  %v1041 = vand.u32 %v1040, 4294901760
  %1042 = vmatmul.f32.gmra.mxu0 %v1041
  %v1043 = vpop.f32.mrf.mxu0
  %v1044 = vadd.f32 %v1020, %v1043
  %1045 = vdwg.mxu0
  %1046 = vmatpush.xpose.msra.mxu0 0.0
  %1047 = vmatpush.xpose.msra.mxu0 0.0
  %1048 = vmatpush.xpose.msra.mxu0 0.0
  %1049 = vmatpush.xpose.msra.mxu0 0.0
  %1050 = vmatpush.xpose.msra.mxu0 0.0
  %1051 = vmatpush.xpose.msra.mxu0 0.0
  %1052 = vmatpush.xpose.msra.mxu0 0.0
  %1053 = vmatpush.xpose.msra.mxu0 0.0
  %1054 = vmatpush.xpose.msra.mxu0 0.0
  %1055 = vmatpush.xpose.msra.mxu0 0.0
  %1056 = vmatpush.xpose.msra.mxu0 0.0
  %1057 = vmatpush.xpose.msra.mxu0 0.0
  %1058 = vmatpush.xpose.msra.mxu0 0.0
  %1059 = vmatpush.xpose.msra.mxu0 0.0
  %1060 = vmatpush.xpose.msra.mxu0 0.0
  %v1061 = vand.u32 %v944, 4294901760
  %v1062 = vsub.f32 %v944, %v1061
  %v1063 = vand.u32 %v1062, 4294901760
  %1064 = vmatpush.xpose.msra.mxu0 %v1063
  %v1065 = vand.u32 %v941, 4294901760
  %1066 = vmatmul.f32.gmra.mxu0 %v1065
  %v1067 = vpop.f32.mrf.mxu0
  %v1068 = vadd.f32 %v1044, %v1067
  %1069 = vdwg.mxu0
  %1070 = vmatpush.xpose.msra.mxu0 0.0
  %1071 = vmatpush.xpose.msra.mxu0 0.0
  %1072 = vmatpush.xpose.msra.mxu0 0.0
  %1073 = vmatpush.xpose.msra.mxu0 0.0
  %1074 = vmatpush.xpose.msra.mxu0 0.0
  %1075 = vmatpush.xpose.msra.mxu0 0.0
  %1076 = vmatpush.xpose.msra.mxu0 0.0
  %1077 = vmatpush.xpose.msra.mxu0 0.0
  %1078 = vmatpush.xpose.msra.mxu0 0.0
  %1079 = vmatpush.xpose.msra.mxu0 0.0
  %1080 = vmatpush.xpose.msra.mxu0 0.0
  %1081 = vmatpush.xpose.msra.mxu0 0.0
  %1082 = vmatpush.xpose.msra.mxu0 0.0
  %1083 = vmatpush.xpose.msra.mxu0 0.0
  %1084 = vmatpush.xpose.msra.mxu0 0.0
  %v1085 = vand.u32 %v944, 4294901760
  %1086 = vmatpush.xpose.msra.mxu0 %v1085
  %v1087 = vand.u32 %v941, 4294901760
  %1088 = vmatmul.f32.gmra.mxu0 %v1087
  %v1089 = vpop.f32.mrf.mxu0
  %v1090 = vadd.f32 %v1068, %v1089
  %1091 = vdwg.mxu0
  %v1093 = vsel %vm27, %v18, 0
  %v1096 = vsel %vm27, %v26, 0
  %1098 = vmatpush.xpose.msra.mxu0 0.0
  %1099 = vmatpush.xpose.msra.mxu0 0.0
  %1100 = vmatpush.xpose.msra.mxu0 0.0
  %1101 = vmatpush.xpose.msra.mxu0 0.0
  %1102 = vmatpush.xpose.msra.mxu0 0.0
  %1103 = vmatpush.xpose.msra.mxu0 0.0
  %1104 = vmatpush.xpose.msra.mxu0 0.0
  %1105 = vmatpush.xpose.msra.mxu0 0.0
  %1106 = vmatpush.xpose.msra.mxu0 0.0
  %1107 = vmatpush.xpose.msra.mxu0 0.0
  %1108 = vmatpush.xpose.msra.mxu0 0.0
  %1109 = vmatpush.xpose.msra.mxu0 0.0
  %1110 = vmatpush.xpose.msra.mxu0 0.0
  %1111 = vmatpush.xpose.msra.mxu0 0.0
  %1112 = vmatpush.xpose.msra.mxu0 0.0
  %v1113 = vand.u32 %v1096, 4294901760
  %1114 = vmatpush.xpose.msra.mxu0 %v1113
  %v1115 = vand.u32 %v1093, 4294901760
  %v1116 = vsub.f32 %v1093, %v1115
  %v1117 = vand.u32 %v1116, 4294901760
  %v1118 = vsub.f32 %v1116, %v1117
  %v1119 = vand.u32 %v1118, 4294901760
  %1120 = vmatmul.f32.gmra.mxu0 %v1119
  %v1121 = vpop.f32.mrf.mxu0
  %v1122 = vadd.f32 0.0, %v1121
  %1123 = vdwg.mxu0
  %1124 = vmatpush.xpose.msra.mxu0 0.0
  %1125 = vmatpush.xpose.msra.mxu0 0.0
  %1126 = vmatpush.xpose.msra.mxu0 0.0
  %1127 = vmatpush.xpose.msra.mxu0 0.0
  %1128 = vmatpush.xpose.msra.mxu0 0.0
  %1129 = vmatpush.xpose.msra.mxu0 0.0
  %1130 = vmatpush.xpose.msra.mxu0 0.0
  %1131 = vmatpush.xpose.msra.mxu0 0.0
  %1132 = vmatpush.xpose.msra.mxu0 0.0
  %1133 = vmatpush.xpose.msra.mxu0 0.0
  %1134 = vmatpush.xpose.msra.mxu0 0.0
  %1135 = vmatpush.xpose.msra.mxu0 0.0
  %1136 = vmatpush.xpose.msra.mxu0 0.0
  %1137 = vmatpush.xpose.msra.mxu0 0.0
  %1138 = vmatpush.xpose.msra.mxu0 0.0
  %v1139 = vand.u32 %v1096, 4294901760
  %v1140 = vsub.f32 %v1096, %v1139
  %v1141 = vand.u32 %v1140, 4294901760
  %v1142 = vsub.f32 %v1140, %v1141
  %v1143 = vand.u32 %v1142, 4294901760
  %1144 = vmatpush.xpose.msra.mxu0 %v1143
  %v1145 = vand.u32 %v1093, 4294901760
  %1146 = vmatmul.f32.gmra.mxu0 %v1145
  %v1147 = vpop.f32.mrf.mxu0
  %v1148 = vadd.f32 %v1122, %v1147
  %1149 = vdwg.mxu0
  %1150 = vmatpush.xpose.msra.mxu0 0.0
  %1151 = vmatpush.xpose.msra.mxu0 0.0
  %1152 = vmatpush.xpose.msra.mxu0 0.0
  %1153 = vmatpush.xpose.msra.mxu0 0.0
  %1154 = vmatpush.xpose.msra.mxu0 0.0
  %1155 = vmatpush.xpose.msra.mxu0 0.0
  %1156 = vmatpush.xpose.msra.mxu0 0.0
  %1157 = vmatpush.xpose.msra.mxu0 0.0
  %1158 = vmatpush.xpose.msra.mxu0 0.0
  %1159 = vmatpush.xpose.msra.mxu0 0.0
  %1160 = vmatpush.xpose.msra.mxu0 0.0
  %1161 = vmatpush.xpose.msra.mxu0 0.0
  %1162 = vmatpush.xpose.msra.mxu0 0.0
  %1163 = vmatpush.xpose.msra.mxu0 0.0
  %1164 = vmatpush.xpose.msra.mxu0 0.0
  %v1165 = vand.u32 %v1096, 4294901760
  %v1166 = vsub.f32 %v1096, %v1165
  %1167 = vmatpush.xpose.msra.mxu0 %v1166
  %v1168 = vand.u32 %v1093, 4294901760
  %v1169 = vsub.f32 %v1093, %v1168
  %1170 = vmatmul.f32.gmra.mxu0 %v1169
  %v1171 = vpop.f32.mrf.mxu0
  %v1172 = vadd.f32 %v1148, %v1171
  %1173 = vdwg.mxu0
  %1174 = vmatpush.xpose.msra.mxu0 0.0
  %1175 = vmatpush.xpose.msra.mxu0 0.0
  %1176 = vmatpush.xpose.msra.mxu0 0.0
  %1177 = vmatpush.xpose.msra.mxu0 0.0
  %1178 = vmatpush.xpose.msra.mxu0 0.0
  %1179 = vmatpush.xpose.msra.mxu0 0.0
  %1180 = vmatpush.xpose.msra.mxu0 0.0
  %1181 = vmatpush.xpose.msra.mxu0 0.0
  %1182 = vmatpush.xpose.msra.mxu0 0.0
  %1183 = vmatpush.xpose.msra.mxu0 0.0
  %1184 = vmatpush.xpose.msra.mxu0 0.0
  %1185 = vmatpush.xpose.msra.mxu0 0.0
  %1186 = vmatpush.xpose.msra.mxu0 0.0
  %1187 = vmatpush.xpose.msra.mxu0 0.0
  %1188 = vmatpush.xpose.msra.mxu0 0.0
  %v1189 = vand.u32 %v1096, 4294901760
  %1190 = vmatpush.xpose.msra.mxu0 %v1189
  %v1191 = vand.u32 %v1093, 4294901760
  %v1192 = vsub.f32 %v1093, %v1191
  %v1193 = vand.u32 %v1192, 4294901760
  %1194 = vmatmul.f32.gmra.mxu0 %v1193
  %v1195 = vpop.f32.mrf.mxu0
  %v1196 = vadd.f32 %v1172, %v1195
  %1197 = vdwg.mxu0
  %1198 = vmatpush.xpose.msra.mxu0 0.0
  %1199 = vmatpush.xpose.msra.mxu0 0.0
  %1200 = vmatpush.xpose.msra.mxu0 0.0
  %1201 = vmatpush.xpose.msra.mxu0 0.0
  %1202 = vmatpush.xpose.msra.mxu0 0.0
  %1203 = vmatpush.xpose.msra.mxu0 0.0
  %1204 = vmatpush.xpose.msra.mxu0 0.0
  %1205 = vmatpush.xpose.msra.mxu0 0.0
  %1206 = vmatpush.xpose.msra.mxu0 0.0
  %1207 = vmatpush.xpose.msra.mxu0 0.0
  %1208 = vmatpush.xpose.msra.mxu0 0.0
  %1209 = vmatpush.xpose.msra.mxu0 0.0
  %1210 = vmatpush.xpose.msra.mxu0 0.0
  %1211 = vmatpush.xpose.msra.mxu0 0.0
  %1212 = vmatpush.xpose.msra.mxu0 0.0
  %v1213 = vand.u32 %v1096, 4294901760
  %v1214 = vsub.f32 %v1096, %v1213
  %v1215 = vand.u32 %v1214, 4294901760
  %1216 = vmatpush.xpose.msra.mxu0 %v1215
  %v1217 = vand.u32 %v1093, 4294901760
  %1218 = vmatmul.f32.gmra.mxu0 %v1217
  %v1219 = vpop.f32.mrf.mxu0
  %v1220 = vadd.f32 %v1196, %v1219
  %1221 = vdwg.mxu0
  %1222 = vmatpush.xpose.msra.mxu0 0.0
  %1223 = vmatpush.xpose.msra.mxu0 0.0
  %1224 = vmatpush.xpose.msra.mxu0 0.0
  %1225 = vmatpush.xpose.msra.mxu0 0.0
  %1226 = vmatpush.xpose.msra.mxu0 0.0
  %1227 = vmatpush.xpose.msra.mxu0 0.0
  %1228 = vmatpush.xpose.msra.mxu0 0.0
  %1229 = vmatpush.xpose.msra.mxu0 0.0
  %1230 = vmatpush.xpose.msra.mxu0 0.0
  %1231 = vmatpush.xpose.msra.mxu0 0.0
  %1232 = vmatpush.xpose.msra.mxu0 0.0
  %1233 = vmatpush.xpose.msra.mxu0 0.0
  %1234 = vmatpush.xpose.msra.mxu0 0.0
  %1235 = vmatpush.xpose.msra.mxu0 0.0
  %1236 = vmatpush.xpose.msra.mxu0 0.0
  %v1237 = vand.u32 %v1096, 4294901760
  %1238 = vmatpush.xpose.msra.mxu0 %v1237
  %v1239 = vand.u32 %v1093, 4294901760
  %1240 = vmatmul.f32.gmra.mxu0 %v1239
  %v1241 = vpop.f32.mrf.mxu0
  %v1242 = vadd.f32 %v1220, %v1241
  %1243 = vdwg.mxu0
  %v1244 = vmul.f32 %v11, %v11
  %v1245 = vmul.f32 %v12, %v12
  %v1246 = vmul.f32 %v13, %v13
  %v1247 = vmul.f32 %v14, %v14
  %v1248 = vmul.f32 %v15, %v15
  %v1249 = vmul.f32 %v16, %v16
  %v1250 = vmul.f32 %v17, %v17
  %v1251 = vmul.f32 %v18, %v18
  %v1252 = vsel %vm27, %v1244, 0.0
  %1253 = vadd.xlane.f32.xlu0 %v1252
  %v1254 = vpop.xlane.xlu0 %1253
  %v1255 = vsel %vm27, %v1245, 0.0
  %1256 = vadd.xlane.f32.xlu0 %v1255
  %v1257 = vpop.xlane.xlu0 %1256
  %v1258 = vsel %vm27, %v1246, 0.0
  %1259 = vadd.xlane.f32.xlu0 %v1258
  %v1260 = vpop.xlane.xlu0 %1259
  %v1261 = vsel %vm27, %v1247, 0.0
  %1262 = vadd.xlane.f32.xlu0 %v1261
  %v1263 = vpop.xlane.xlu0 %1262
  %v1264 = vsel %vm27, %v1248, 0.0
  %1265 = vadd.xlane.f32.xlu0 %v1264
  %v1266 = vpop.xlane.xlu0 %1265
  %v1267 = vsel %vm27, %v1249, 0.0
  %1268 = vadd.xlane.f32.xlu0 %v1267
  %v1269 = vpop.xlane.xlu0 %1268
  %v1270 = vsel %vm27, %v1250, 0.0
  %1271 = vadd.xlane.f32.xlu0 %v1270
  %v1272 = vpop.xlane.xlu0 %1271
  %v1273 = vsel %vm27, %v1251, 0.0
  %1274 = vadd.xlane.f32.xlu0 %v1273
  %v1275 = vpop.xlane.xlu0 %1274
  %v1276 = vmul.f32 %v19, %v19
  %v1277 = vmul.f32 %v20, %v20
  %v1278 = vmul.f32 %v21, %v21
  %v1279 = vmul.f32 %v22, %v22
  %v1280 = vmul.f32 %v23, %v23
  %v1281 = vmul.f32 %v24, %v24
  %v1282 = vmul.f32 %v25, %v25
  %v1283 = vmul.f32 %v26, %v26
  %v1284 = vsel %vm27, %v1276, 0.0
  %1285 = vadd.xlane.f32.xlu0 %v1284
  %v1286 = vpop.xlane.xlu0 %1285
  %v1287 = vsel %vm27, %v1277, 0.0
  %1288 = vadd.xlane.f32.xlu0 %v1287
  %v1289 = vpop.xlane.xlu0 %1288
  %v1290 = vsel %vm27, %v1278, 0.0
  %1291 = vadd.xlane.f32.xlu0 %v1290
  %v1292 = vpop.xlane.xlu0 %1291
  %v1293 = vsel %vm27, %v1279, 0.0
  %1294 = vadd.xlane.f32.xlu0 %v1293
  %v1295 = vpop.xlane.xlu0 %1294
  %v1296 = vsel %vm27, %v1280, 0.0
  %1297 = vadd.xlane.f32.xlu0 %v1296
  %v1298 = vpop.xlane.xlu0 %1297
  %v1299 = vsel %vm27, %v1281, 0.0
  %1300 = vadd.xlane.f32.xlu0 %v1299
  %v1301 = vpop.xlane.xlu0 %1300
  %v1302 = vsel %vm27, %v1282, 0.0
  %1303 = vadd.xlane.f32.xlu0 %v1302
  %v1304 = vpop.xlane.xlu0 %1303
  %v1305 = vsel %vm27, %v1283, 0.0
  %1306 = vadd.xlane.f32.xlu0 %v1305
  %v1307 = vpop.xlane.xlu0 %1306
  %v1316 = vlaneseq
  %v1317 = vand.u32 %v1316, 127
  %v1318 = vperm.slane %v1286, %v1317
  %v1319 = vperm.slane %v1289, %v1317
  %v1320 = vperm.slane %v1292, %v1317
  %v1321 = vperm.slane %v1295, %v1317
  %v1322 = vperm.slane %v1298, %v1317
  %v1323 = vperm.slane %v1301, %v1317
  %v1324 = vperm.slane %v1304, %v1317
  %v1325 = vperm.slane %v1307, %v1317
  %vm1326 = vcmask 1041409
  %vm1327 = vcmask 1042434
  %v1328 = vsel %vm1327, %v1318, %v1318
  %vm1329 = vcmask 1043459
  %v1330 = vsel %vm1329, %v1318, %v1328
  %vm1331 = vcmask 1044484
  %v1332 = vsel %vm1331, %v1318, %v1330
  %vm1333 = vcmask 1045509
  %v1334 = vsel %vm1333, %v1318, %v1332
  %vm1335 = vcmask 1046534
  %v1336 = vsel %vm1335, %v1318, %v1334
  %vm1337 = vcmask 1047559
  %v1338 = vsel %vm1337, %v1318, %v1336
  %v1339 = vsel %vm1327, %v1319, %v1319
  %v1340 = vsel %vm1329, %v1319, %v1339
  %v1341 = vsel %vm1331, %v1319, %v1340
  %v1342 = vsel %vm1333, %v1319, %v1341
  %v1343 = vsel %vm1335, %v1319, %v1342
  %v1344 = vsel %vm1337, %v1319, %v1343
  %v1345 = vsel %vm1327, %v1320, %v1320
  %v1346 = vsel %vm1329, %v1320, %v1345
  %v1347 = vsel %vm1331, %v1320, %v1346
  %v1348 = vsel %vm1333, %v1320, %v1347
  %v1349 = vsel %vm1335, %v1320, %v1348
  %v1350 = vsel %vm1337, %v1320, %v1349
  %v1351 = vsel %vm1327, %v1321, %v1321
  %v1352 = vsel %vm1329, %v1321, %v1351
  %v1353 = vsel %vm1331, %v1321, %v1352
  %v1354 = vsel %vm1333, %v1321, %v1353
  %v1355 = vsel %vm1335, %v1321, %v1354
  %v1356 = vsel %vm1337, %v1321, %v1355
  %v1357 = vsel %vm1327, %v1322, %v1322
  %v1358 = vsel %vm1329, %v1322, %v1357
  %v1359 = vsel %vm1331, %v1322, %v1358
  %v1360 = vsel %vm1333, %v1322, %v1359
  %v1361 = vsel %vm1335, %v1322, %v1360
  %v1362 = vsel %vm1337, %v1322, %v1361
  %v1363 = vsel %vm1327, %v1323, %v1323
  %v1364 = vsel %vm1329, %v1323, %v1363
  %v1365 = vsel %vm1331, %v1323, %v1364
  %v1366 = vsel %vm1333, %v1323, %v1365
  %v1367 = vsel %vm1335, %v1323, %v1366
  %v1368 = vsel %vm1337, %v1323, %v1367
  %v1369 = vsel %vm1327, %v1324, %v1324
  %v1370 = vsel %vm1329, %v1324, %v1369
  %v1371 = vsel %vm1331, %v1324, %v1370
  %v1372 = vsel %vm1333, %v1324, %v1371
  %v1373 = vsel %vm1335, %v1324, %v1372
  %v1374 = vsel %vm1337, %v1324, %v1373
  %v1375 = vsel %vm1327, %v1325, %v1325
  %v1376 = vsel %vm1329, %v1325, %v1375
  %v1377 = vsel %vm1331, %v1325, %v1376
  %v1378 = vsel %vm1333, %v1325, %v1377
  %v1379 = vsel %vm1335, %v1325, %v1378
  %v1380 = vsel %vm1337, %v1325, %v1379
  %v1389 = vadd.f32 %v1254, %v1338
  %v1390 = vadd.f32 %v1257, %v1344
  %v1391 = vadd.f32 %v1260, %v1350
  %v1392 = vadd.f32 %v1263, %v1356
  %v1393 = vadd.f32 %v1266, %v1362
  %v1394 = vadd.f32 %v1269, %v1368
  %v1395 = vadd.f32 %v1272, %v1374
  %v1396 = vadd.f32 %v1275, %v1380
  %v1397 = vmul.f32 %v178, 2.0
  %v1398 = vmul.f32 %v330, 2.0
  %v1399 = vmul.f32 %v482, 2.0
  %v1400 = vmul.f32 %v634, 2.0
  %v1401 = vmul.f32 %v786, 2.0
  %v1402 = vmul.f32 %v938, 2.0
  %v1403 = vmul.f32 %v1090, 2.0
  %v1404 = vmul.f32 %v1242, 2.0
  %v1405 = vsub.f32 %v1389, %v1397
  %v1406 = vsub.f32 %v1390, %v1398
  %v1407 = vsub.f32 %v1391, %v1399
  %v1408 = vsub.f32 %v1392, %v1400
  %v1409 = vsub.f32 %v1393, %v1401
  %v1410 = vsub.f32 %v1394, %v1402
  %v1411 = vsub.f32 %v1395, %v1403
  %v1412 = vsub.f32 %v1396, %v1404
  %v1413 = vmax.f32 %v1405, 0.0
  %v1414 = vmax.f32 %v1406, 0.0
  %v1415 = vmax.f32 %v1407, 0.0
  %v1416 = vmax.f32 %v1408, 0.0
  %v1417 = vmax.f32 %v1409, 0.0
  %v1418 = vmax.f32 %v1410, 0.0
  %v1419 = vmax.f32 %v1411, 0.0
  %v1420 = vmax.f32 %v1412, 0.0
  %v1421 = vrsqrt.pop %v1413
  %v1422 = vmul.f32 %v1421, %v1413
  %v1423 = vmul.f32 %v1422, %v1421
  %v1424 = vmul.f32 0.5, %v1423
  %v1425 = vsub.f32 1.5, %v1424
  %v1426 = vmul.f32 %v1421, %v1425
  %v1427 = vmul.f32 %v1413, %v1426
  %vm1428 = vcmp.eq.f32.partialorder %v1413, inf
  %v1429 = vsel %vm1428, %v1413, %v1427
  %vm1430 = vcmp.eq.f32.partialorder %v1413, 0.0
  %v1431 = vand.u32 %v1413, 2147483648
  %v1432 = vsel %vm1430, %v1431, %v1429
  %v1433 = vrsqrt.pop %v1414
  %v1434 = vmul.f32 %v1433, %v1414
  %v1435 = vmul.f32 %v1434, %v1433
  %v1436 = vmul.f32 0.5, %v1435
  %v1437 = vsub.f32 1.5, %v1436
  %v1438 = vmul.f32 %v1433, %v1437
  %v1439 = vmul.f32 %v1414, %v1438
  %vm1440 = vcmp.eq.f32.partialorder %v1414, inf
  %v1441 = vsel %vm1440, %v1414, %v1439
  %vm1442 = vcmp.eq.f32.partialorder %v1414, 0.0
  %v1443 = vand.u32 %v1414, 2147483648
  %v1444 = vsel %vm1442, %v1443, %v1441
  %v1445 = vrsqrt.pop %v1415
  %v1446 = vmul.f32 %v1445, %v1415
  %v1447 = vmul.f32 %v1446, %v1445
  %v1448 = vmul.f32 0.5, %v1447
  %v1449 = vsub.f32 1.5, %v1448
  %v1450 = vmul.f32 %v1445, %v1449
  %v1451 = vmul.f32 %v1415, %v1450
  %vm1452 = vcmp.eq.f32.partialorder %v1415, inf
  %v1453 = vsel %vm1452, %v1415, %v1451
  %vm1454 = vcmp.eq.f32.partialorder %v1415, 0.0
  %v1455 = vand.u32 %v1415, 2147483648
  %v1456 = vsel %vm1454, %v1455, %v1453
  %v1457 = vrsqrt.pop %v1416
  %v1458 = vmul.f32 %v1457, %v1416
  %v1459 = vmul.f32 %v1458, %v1457
  %v1460 = vmul.f32 0.5, %v1459
  %v1461 = vsub.f32 1.5, %v1460
  %v1462 = vmul.f32 %v1457, %v1461
  %v1463 = vmul.f32 %v1416, %v1462
  %vm1464 = vcmp.eq.f32.partialorder %v1416, inf
  %v1465 = vsel %vm1464, %v1416, %v1463
  %vm1466 = vcmp.eq.f32.partialorder %v1416, 0.0
  %v1467 = vand.u32 %v1416, 2147483648
  %v1468 = vsel %vm1466, %v1467, %v1465
  %v1469 = vrsqrt.pop %v1417
  %v1470 = vmul.f32 %v1469, %v1417
  %v1471 = vmul.f32 %v1470, %v1469
  %v1472 = vmul.f32 0.5, %v1471
  %v1473 = vsub.f32 1.5, %v1472
  %v1474 = vmul.f32 %v1469, %v1473
  %v1475 = vmul.f32 %v1417, %v1474
  %vm1476 = vcmp.eq.f32.partialorder %v1417, inf
  %v1477 = vsel %vm1476, %v1417, %v1475
  %vm1478 = vcmp.eq.f32.partialorder %v1417, 0.0
  %v1479 = vand.u32 %v1417, 2147483648
  %v1480 = vsel %vm1478, %v1479, %v1477
  %v1481 = vrsqrt.pop %v1418
  %v1482 = vmul.f32 %v1481, %v1418
  %v1483 = vmul.f32 %v1482, %v1481
  %v1484 = vmul.f32 0.5, %v1483
  %v1485 = vsub.f32 1.5, %v1484
  %v1486 = vmul.f32 %v1481, %v1485
  %v1487 = vmul.f32 %v1418, %v1486
  %vm1488 = vcmp.eq.f32.partialorder %v1418, inf
  %v1489 = vsel %vm1488, %v1418, %v1487
  %vm1490 = vcmp.eq.f32.partialorder %v1418, 0.0
  %v1491 = vand.u32 %v1418, 2147483648
  %v1492 = vsel %vm1490, %v1491, %v1489
  %v1493 = vrsqrt.pop %v1419
  %v1494 = vmul.f32 %v1493, %v1419
  %v1495 = vmul.f32 %v1494, %v1493
  %v1496 = vmul.f32 0.5, %v1495
  %v1497 = vsub.f32 1.5, %v1496
  %v1498 = vmul.f32 %v1493, %v1497
  %v1499 = vmul.f32 %v1419, %v1498
  %vm1500 = vcmp.eq.f32.partialorder %v1419, inf
  %v1501 = vsel %vm1500, %v1419, %v1499
  %vm1502 = vcmp.eq.f32.partialorder %v1419, 0.0
  %v1503 = vand.u32 %v1419, 2147483648
  %v1504 = vsel %vm1502, %v1503, %v1501
  %v1505 = vrsqrt.pop %v1420
  %v1506 = vmul.f32 %v1505, %v1420
  %v1507 = vmul.f32 %v1506, %v1505
  %v1508 = vmul.f32 0.5, %v1507
  %v1509 = vsub.f32 1.5, %v1508
  %v1510 = vmul.f32 %v1505, %v1509
  %v1511 = vmul.f32 %v1420, %v1510
  %vm1512 = vcmp.eq.f32.partialorder %v1420, inf
  %v1513 = vsel %vm1512, %v1420, %v1511
  %vm1514 = vcmp.eq.f32.partialorder %v1420, 0.0
  %v1515 = vand.u32 %v1420, 2147483648
  %v1516 = vsel %vm1514, %v1515, %v1513
  %v1517 = vmin.f32 %v1432, 10.0
  %v1518 = vmin.f32 %v1444, 10.0
  %v1519 = vmin.f32 %v1456, 10.0
  %v1520 = vmin.f32 %v1468, 10.0
  %v1521 = vmin.f32 %v1480, 10.0
  %v1522 = vmin.f32 %v1492, 10.0
  %v1523 = vmin.f32 %v1504, 10.0
  %v1524 = vmin.f32 %v1516, 10.0
  %v1525 = vsub.f32 0.0, %v1517
  %v1526 = vsub.f32 0.0, %v1518
  %v1527 = vsub.f32 0.0, %v1519
  %v1528 = vsub.f32 0.0, %v1520
  %v1529 = vsub.f32 0.0, %v1521
  %v1530 = vsub.f32 0.0, %v1522
  %v1531 = vsub.f32 0.0, %v1523
  %v1532 = vsub.f32 0.0, %v1524
  %v1533 = vmul.f32 %v1525, 1.442695
  %v1534 = vpow.pop %v1533
  %v1535 = vmul.f32 %v1526, 1.442695
  %v1536 = vpow.pop %v1535
  %v1537 = vmul.f32 %v1527, 1.442695
  %v1538 = vpow.pop %v1537
  %v1539 = vmul.f32 %v1528, 1.442695
  %v1540 = vpow.pop %v1539
  %v1541 = vmul.f32 %v1529, 1.442695
  %v1542 = vpow.pop %v1541
  %v1543 = vmul.f32 %v1530, 1.442695
  %v1544 = vpow.pop %v1543
  %v1545 = vmul.f32 %v1531, 1.442695
  %v1546 = vpow.pop %v1545
  %v1547 = vmul.f32 %v1532, 1.442695
  %v1548 = vpow.pop %v1547
  %s1549 = smul.u32 0, 8
  %v1550 = vlaneseq
  %v1551 = vshrl.u32 %v1550, 7
  %v1552 = vstv %s1549
  %v1553 = vadd.s32 %v1551, %v1552
  %vm1554 = vcmp.eq.s32.totalorder %v1553, %v1317
  %v1555 = vsel %vm1554, 1, 0
  %vm1556 = vcmp.eq.s32.totalorder %v1555, 1
  %v1557 = vsel %vm1556, 0.0, %v1534
  %v1558 = vsel %vm1556, 0.0, %v1536
  %v1559 = vsel %vm1556, 0.0, %v1538
  %v1560 = vsel %vm1556, 0.0, %v1540
  %v1561 = vsel %vm1556, 0.0, %v1542
  %v1562 = vsel %vm1556, 0.0, %v1544
  %v1563 = vsel %vm1556, 0.0, %v1546
  %v1564 = vsel %vm1556, 0.0, %v1548
  %vm1565 = vcmask 64512
  %v1566 = vsel %vm1565, %v1557, 0.0
  %1567 = vadd.xlane.f32.xlu0 %v1566
  %v1568 = vpop.xlane.xlu0 %1567
  %v1569 = vsel %vm1565, %v1558, 0.0
  %1570 = vadd.xlane.f32.xlu0 %v1569
  %v1571 = vpop.xlane.xlu0 %1570
  %v1572 = vsel %vm1565, %v1559, 0.0
  %1573 = vadd.xlane.f32.xlu0 %v1572
  %v1574 = vpop.xlane.xlu0 %1573
  %v1575 = vsel %vm1565, %v1560, 0.0
  %1576 = vadd.xlane.f32.xlu0 %v1575
  %v1577 = vpop.xlane.xlu0 %1576
  %v1578 = vsel %vm1565, %v1561, 0.0
  %1579 = vadd.xlane.f32.xlu0 %v1578
  %v1580 = vpop.xlane.xlu0 %1579
  %v1581 = vsel %vm1565, %v1562, 0.0
  %1582 = vadd.xlane.f32.xlu0 %v1581
  %v1583 = vpop.xlane.xlu0 %1582
  %v1584 = vsel %vm1565, %v1563, 0.0
  %1585 = vadd.xlane.f32.xlu0 %v1584
  %v1586 = vpop.xlane.xlu0 %1585
  %v1587 = vsel %vm1565, %v1564, 0.0
  %1588 = vadd.xlane.f32.xlu0 %v1587
  %v1589 = vpop.xlane.xlu0 %1588
  %v1590 = vadd.f32 %v1568, 1.0
  %v1591 = vadd.f32 %v1571, 1.0
  %v1592 = vadd.f32 %v1574, 1.0
  %v1593 = vadd.f32 %v1577, 1.0
  %v1594 = vadd.f32 %v1580, 1.0
  %v1595 = vadd.f32 %v1583, 1.0
  %v1596 = vadd.f32 %v1586, 1.0
  %v1597 = vadd.f32 %v1589, 1.0
  %v1606 = vperm.slane %v1590, %v1317
  %v1607 = vperm.slane %v1591, %v1317
  %v1608 = vperm.slane %v1592, %v1317
  %v1609 = vperm.slane %v1593, %v1317
  %v1610 = vperm.slane %v1594, %v1317
  %v1611 = vperm.slane %v1595, %v1317
  %v1612 = vperm.slane %v1596, %v1317
  %v1613 = vperm.slane %v1597, %v1317
  %v1614 = vsel %vm1326, %v1607, %v1606
  %v1615 = vsel %vm1327, %v1608, %v1614
  %v1616 = vsel %vm1329, %v1609, %v1615
  %v1617 = vsel %vm1331, %v1610, %v1616
  %v1618 = vsel %vm1333, %v1611, %v1617
  %v1619 = vsel %vm1335, %v1612, %v1618
  %v1620 = vsel %vm1337, %v1613, %v1619
  %1622 = vst.msk [vmem:[%s2] sm:$0xff] %vm1565, %v1620
  // Predicated region
  $region10: #{minibatch_discrimination.3} parent=0 // pred_check
    _
  $region11: #{minibatch_discrimination.3} parent=0 // pred_check_branch
    %1624 = sbr.rel (0) target = $region13
  $region12: #{minibatch_discrimination.3} parent=0 // pred_region
    _
  $region13: #{minibatch_discrimination.3} parent=0 // pred_fallthru
    _
  // Predicated region
  $region14: #{minibatch_discrimination.3} parent=0 // pred_check
    _
  $region15: #{minibatch_discrimination.3} parent=0 // pred_check_branch
    %1626 = sbr.rel (0) target = $region17
  $region16: #{minibatch_discrimination.3} parent=0 // pred_region
    _
  $region17: #{minibatch_discrimination.3} parent=0 // pred_fallthru
    _

</llo_original>
